<compile_context>
chip_gen: v5e
topology: v5e:2x2
jax: 0.10.0
libtpu: 0.0.40
codegen_flags: <defaults>
</compile_context>

<pallas_src>
import functools

import jax
import jax.numpy as jnp
from jax import lax
from jax.experimental import pallas as pl
from jax.experimental.pallas import tpu as pltpu

EPS = 1e-5  # nn.InstanceNorm1d default eps


def encoder_kernel(x_ref, wq_ref, bq_ref, wk_ref, bk_ref, wv_ref, bv_ref,
                   wo_ref, bo_ref, o_ref, *, num_heads, num_layers):
    """All num_layers encoder layers for one batch element, fused in one call.

    x_ref / o_ref blocks: (1, L, D); weight blocks: (D, D); bias blocks: (1, D).
    """
    L, D = x_ref.shape[1], x_ref.shape[2]
    H = num_heads
    dh = D // H
    scale = 1.0 / jnp.sqrt(jnp.float32(dh))

    # Weights are shared by every layer (_get_clones does not deepcopy): load
    # them once and reuse across the fused layer loop.  Fold the 1/sqrt(dh)
    # score scale into Wq/bq a single time (D*D work once, not per layer).
    wq = wq_ref[...].astype(jnp.float32) * scale
    wk = wk_ref[...].astype(jnp.float32)
    wv = wv_ref[...].astype(jnp.float32)
    wo = wo_ref[...].astype(jnp.float32)
    # Hoist bias broadcasts to (L, D) out of the unrolled layer loop.
    bq = jnp.broadcast_to(bq_ref[...].astype(jnp.float32) * scale, (L, D))
    bk = jnp.broadcast_to(bk_ref[...].astype(jnp.float32), (L, D))
    bv = jnp.broadcast_to(bv_ref[...].astype(jnp.float32), (L, D))
    bo = jnp.broadcast_to(bo_ref[...].astype(jnp.float32), (L, D))

    def layer(_, x):
        # --- multi-head self attention (q = k = v = x) ------------------------
        q = jnp.dot(x, wq, preferred_element_type=jnp.float32) + bq
        k = jnp.dot(x, wk, preferred_element_type=jnp.float32) + bk
        v = jnp.dot(x, wv, preferred_element_type=jnp.float32) + bv

        # Per-head attention with the output projection fused into the head
        # loop: accumulate o_h @ Wo[h*dh:(h+1)*dh, :] into one (L, D) f32
        # accumulator -> no lane-axis concatenate of dh-wide chunks.
        attn = bo
        for h in range(H):                                   # static, small
            sl = slice(h * dh, (h + 1) * dh)
            # q_h @ k_h^T without materializing an explicit transpose.
            s = lax.dot_general(q[:, sl], k[:, sl],
                                (((1,), (1,)), ((), ())),
                                preferred_element_type=jnp.float32)  # (L, L)
            s = s - jnp.max(s, axis=-1, keepdims=True)
            p = jnp.exp(s)
            # EUP reciprocal (free slot) instead of a VPU divide.
            p = p * pl.reciprocal(jnp.sum(p, axis=-1, keepdims=True),
                                  approx=True)
            oh = jnp.dot(p, v[:, sl],
                         preferred_element_type=jnp.float32)         # (L, dh)
            attn = attn + jnp.dot(oh, wo[sl, :],
                                  preferred_element_type=jnp.float32)

        # --- residual ---------------------------------------------------------
        y = x + attn

        # --- InstanceNorm1d over the sequence axis (biased var, no affine) ----
        mean = jnp.mean(y, axis=0, keepdims=True)             # (1, D)
        d = y - mean
        var = jnp.mean(d * d, axis=0, keepdims=True)
        yn = d * lax.rsqrt(var + EPS)

        # --- ReLU --------------------------------------------------------------
        return jnp.maximum(yn, 0.0)

    x0 = x_ref[0].astype(jnp.float32)                         # (L, D)
    out = lax.fori_loop(0, num_layers, layer, x0, unroll=True)
    o_ref[0] = out.astype(o_ref.dtype)


def make_encoder_call(B, L, D, num_heads, num_layers, dtype):
    kernel = functools.partial(encoder_kernel,
                               num_heads=num_heads, num_layers=num_layers)
    x_spec = pl.BlockSpec((1, L, D), lambda b: (b, 0, 0))
    w_spec = pl.BlockSpec((D, D), lambda b: (0, 0))   # constant index -> no re-DMA
    b_spec = pl.BlockSpec((1, D), lambda b: (0, 0))
    return pl.pallas_call(
        kernel,
        out_shape=jax.ShapeDtypeStruct((B, L, D), dtype),
        grid=(B,),
        in_specs=[x_spec,
                  w_spec, b_spec,   # Wq, bq
                  w_spec, b_spec,   # Wk, bk
                  w_spec, b_spec,   # Wv, bv
                  w_spec, b_spec],  # Wo, bo
        out_specs=pl.BlockSpec((1, L, D), lambda b: (b, 0, 0)),
        compiler_params=pltpu.CompilerParams(
            dimension_semantics=("parallel",)),   # v7x: one batch element per TC
    )


def transformer_encoder_forward(src, params, *, num_layers, num_heads):
    """src: [L, B, D] (PyTorch layout). Returns [L, B, D]."""
    x = jnp.transpose(src, (1, 0, 2))                 # paid once for all layers
    B, L, D = x.shape
    assert D % num_heads == 0
    wq, bq, wk, bk, wv, bv, wo, bo = params
    out = make_encoder_call(B, L, D, num_heads, num_layers, x.dtype)(
        x, wq, bq, wk, bk, wv, bv, wo, bo)
    return jnp.transpose(out, (1, 0, 2))              # -> [L, B, D]


# ----------------------------- pure-JAX reference -----------------------------
def _reference_forward(src, params, *, num_layers, num_heads):
    wq, bq, wk, bk, wv, bv, wo, bo = params
    x = src.astype(jnp.float32)                       # [L, B, D]
    L, B, D = x.shape
    dh = D // num_heads
    for _ in range(num_layers):
        q = jnp.einsum('lbd,de->lbe', x, wq) + bq[0]
        k = jnp.einsum('lbd,de->lbe', x, wk) + bk[0]
        v = jnp.einsum('lbd,de->lbe', x, wv) + bv[0]
        qh = q.reshape(L, B, num_heads, dh)
        kh = k.reshape(L, B, num_heads, dh)
        vh = v.reshape(L, B, num_heads, dh)
        s = jnp.einsum('qbhd,kbhd->bhqk', qh, kh) / jnp.sqrt(jnp.float32(dh))
        p = jax.nn.softmax(s, axis=-1)
        a = jnp.einsum('bhqk,kbhd->qbhd', p, vh).reshape(L, B, D)
        a = jnp.einsum('lbd,de->lbe', a, wo) + bo[0]
        y = x + a
        mean = jnp.mean(y, axis=0, keepdims=True)
        var = jnp.mean((y - mean) ** 2, axis=0, keepdims=True)
        x = jnp.maximum((y - mean) / jnp.sqrt(var + EPS), 0.0)
    return x


if __name__ == "__main__":
    # Small shapes consistent with the module: src [num_imgs, batch, d_model].
    L, B, D = 8, 2, 32
    NUM_HEADS = 4
    NUM_LAYERS = 2

    key = jax.random.PRNGKey(0)
    ks = jax.random.split(key, 9)
    src = jax.random.normal(ks[0], (L, B, D), dtype=jnp.float32)

    def w(k):
        return 0.1 * jax.random.normal(k, (D, D), dtype=jnp.float32)

    def bias(k):
        return 0.1 * jax.random.normal(k, (1, D), dtype=jnp.float32)

    params = (w(ks[1]), bias(ks[2]),   # Wq, bq
              w(ks[3]), bias(ks[4]),   # Wk, bk
              w(ks[5]), bias(ks[6]),   # Wv, bv
              w(ks[7]), bias(ks[8]))   # Wo, bo

    out = transformer_encoder_forward(src, params,
                                      num_layers=NUM_LAYERS, num_heads=NUM_HEADS)
    out = jax.block_until_ready(out)

    ref = _reference_forward(src, params, num_layers=NUM_LAYERS, num_heads=NUM_HEADS)
    assert out.shape == (L, B, D)
    # Tolerance relaxed slightly vs. exact f32 because the softmax denominator
    # uses the hardware approximate reciprocal (EUP vrcp).
    assert jnp.allclose(out, ref, atol=5e-3, rtol=5e-3), "mismatch vs reference"

    print("KERNEL_OK")
</pallas_src>

<mosaic_0001>
module attributes {stable_mosaic.version = 11 : i64} {
  func.func @encoder_kernel(%arg0: i32, %arg1: memref<1x8x32xf32, #tpu.memory_space<vmem>>, %arg2: memref<32x32xf32, #tpu.memory_space<vmem>>, %arg3: memref<1x32xf32, #tpu.memory_space<vmem>>, %arg4: memref<32x32xf32, #tpu.memory_space<vmem>>, %arg5: memref<1x32xf32, #tpu.memory_space<vmem>>, %arg6: memref<32x32xf32, #tpu.memory_space<vmem>>, %arg7: memref<1x32xf32, #tpu.memory_space<vmem>>, %arg8: memref<32x32xf32, #tpu.memory_space<vmem>>, %arg9: memref<1x32xf32, #tpu.memory_space<vmem>>, %arg10: memref<1x8x32xf32, #tpu.memory_space<vmem>>) attributes {dimension_semantics = [#tpu.dimension_semantics<parallel>], iteration_bounds = array<i64: 2>, scalar_prefetch = 0 : i64, scratch_operands = 0 : i64, tpu.core_type = #tpu.core_type<tc>, window_params = [{transform_indices = @transform_0, window_bounds = array<i64: 1, 8, 32>}, {pipeline_mode = #tpu.pipeline_mode<synchronous>, transform_indices = @transform_1, window_bounds = array<i64: 32, 32>}, {pipeline_mode = #tpu.pipeline_mode<synchronous>, transform_indices = @transform_2, window_bounds = array<i64: 1, 32>}, {pipeline_mode = #tpu.pipeline_mode<synchronous>, transform_indices = @transform_3, window_bounds = array<i64: 32, 32>}, {pipeline_mode = #tpu.pipeline_mode<synchronous>, transform_indices = @transform_4, window_bounds = array<i64: 1, 32>}, {pipeline_mode = #tpu.pipeline_mode<synchronous>, transform_indices = @transform_5, window_bounds = array<i64: 32, 32>}, {pipeline_mode = #tpu.pipeline_mode<synchronous>, transform_indices = @transform_6, window_bounds = array<i64: 1, 32>}, {pipeline_mode = #tpu.pipeline_mode<synchronous>, transform_indices = @transform_7, window_bounds = array<i64: 32, 32>}, {pipeline_mode = #tpu.pipeline_mode<synchronous>, transform_indices = @transform_8, window_bounds = array<i64: 1, 32>}, {transform_indices = @transform_9, window_bounds = array<i64: 1, 8, 32>}]} {
    %cst = arith.constant 8.000000e+00 : f32
    %0 = math.sqrt %cst : f32
    %cst_0 = arith.constant 1.000000e+00 : f32
    %1 = arith.divf %cst_0, %0 : f32
    %c0 = arith.constant 0 : index
    %c0_1 = arith.constant 0 : index
    %2 = vector.load %arg2[%c0, %c0_1] : memref<32x32xf32, #tpu.memory_space<vmem>>, vector<32x32xf32>
    %3 = vector.broadcast %1 : f32 to vector<32x32xf32>
    %4 = arith.mulf %2, %3 : vector<32x32xf32>
    %c0_2 = arith.constant 0 : index
    %c0_3 = arith.constant 0 : index
    %5 = vector.load %arg4[%c0_2, %c0_3] : memref<32x32xf32, #tpu.memory_space<vmem>>, vector<32x32xf32>
    %c0_4 = arith.constant 0 : index
    %c0_5 = arith.constant 0 : index
    %6 = vector.load %arg6[%c0_4, %c0_5] : memref<32x32xf32, #tpu.memory_space<vmem>>, vector<32x32xf32>
    %c0_6 = arith.constant 0 : index
    %c0_7 = arith.constant 0 : index
    %7 = vector.load %arg8[%c0_6, %c0_7] : memref<32x32xf32, #tpu.memory_space<vmem>>, vector<32x32xf32>
    %c0_8 = arith.constant 0 : index
    %c0_9 = arith.constant 0 : index
    %8 = vector.load %arg3[%c0_8, %c0_9] : memref<1x32xf32, #tpu.memory_space<vmem>>, vector<1x32xf32>
    %9 = vector.broadcast %1 : f32 to vector<1x32xf32>
    %10 = arith.mulf %8, %9 : vector<1x32xf32>
    %11 = vector.shape_cast %10 : vector<1x32xf32> to vector<1x32xf32>
    %12 = vector.broadcast %11 : vector<1x32xf32> to vector<8x32xf32>
    %c0_10 = arith.constant 0 : index
    %c0_11 = arith.constant 0 : index
    %13 = vector.load %arg5[%c0_10, %c0_11] : memref<1x32xf32, #tpu.memory_space<vmem>>, vector<1x32xf32>
    %14 = vector.shape_cast %13 : vector<1x32xf32> to vector<1x32xf32>
    %15 = vector.broadcast %14 : vector<1x32xf32> to vector<8x32xf32>
    %c0_12 = arith.constant 0 : index
    %c0_13 = arith.constant 0 : index
    %16 = vector.load %arg7[%c0_12, %c0_13] : memref<1x32xf32, #tpu.memory_space<vmem>>, vector<1x32xf32>
    %17 = vector.shape_cast %16 : vector<1x32xf32> to vector<1x32xf32>
    %18 = vector.broadcast %17 : vector<1x32xf32> to vector<8x32xf32>
    %c0_14 = arith.constant 0 : index
    %c0_15 = arith.constant 0 : index
    %19 = vector.load %arg9[%c0_14, %c0_15] : memref<1x32xf32, #tpu.memory_space<vmem>>, vector<1x32xf32>
    %20 = vector.shape_cast %19 : vector<1x32xf32> to vector<1x32xf32>
    %21 = vector.broadcast %20 : vector<1x32xf32> to vector<8x32xf32>
    %c0_16 = arith.constant 0 : index
    %c0_17 = arith.constant 0 : index
    %c0_18 = arith.constant 0 : index
    %22 = vector.load %arg1[%c0_16, %c0_17, %c0_18] : memref<1x8x32xf32, #tpu.memory_space<vmem>>, vector<1x8x32xf32>
    %23 = vector.shape_cast %22 : vector<1x8x32xf32> to vector<8x32xf32>
    %c0_i32 = arith.constant 0 : i32
    %cst_19 = arith.constant dense<0.000000e+00> : vector<8x32xf32>
    %24 = tpu.matmul %23, %4, %cst_19 {dimension_numbers = #tpu.dot_dimension_numbers<[1], [0], [0], [1], [0, 0, 1, 1], [], []>} : vector<8x32xf32>, vector<32x32xf32>, vector<8x32xf32> -> vector<8x32xf32>
    %25 = arith.addf %24, %12 : vector<8x32xf32>
    %cst_20 = arith.constant dense<0.000000e+00> : vector<8x32xf32>
    %26 = tpu.matmul %23, %5, %cst_20 {dimension_numbers = #tpu.dot_dimension_numbers<[1], [0], [0], [1], [0, 0, 1, 1], [], []>} : vector<8x32xf32>, vector<32x32xf32>, vector<8x32xf32> -> vector<8x32xf32>
    %27 = arith.addf %26, %15 : vector<8x32xf32>
    %cst_21 = arith.constant dense<0.000000e+00> : vector<8x32xf32>
    %28 = tpu.matmul %23, %6, %cst_21 {dimension_numbers = #tpu.dot_dimension_numbers<[1], [0], [0], [1], [0, 0, 1, 1], [], []>} : vector<8x32xf32>, vector<32x32xf32>, vector<8x32xf32> -> vector<8x32xf32>
    %29 = arith.addf %28, %18 : vector<8x32xf32>
    %30 = vector.extract_strided_slice %25 {offsets = [0, 0], sizes = [8, 8], strides = [1, 1]} : vector<8x32xf32> to vector<8x8xf32>
    %31 = vector.extract_strided_slice %27 {offsets = [0, 0], sizes = [8, 8], strides = [1, 1]} : vector<8x32xf32> to vector<8x8xf32>
    %cst_22 = arith.constant dense<0.000000e+00> : vector<8x8xf32>
    %32 = tpu.matmul %30, %31, %cst_22 {dimension_numbers = #tpu.dot_dimension_numbers<[1], [1], [0], [0], [0, 0, 1, 0], [], []>} : vector<8x8xf32>, vector<8x8xf32>, vector<8x8xf32> -> vector<8x8xf32>
    %cst_23 = arith.constant dense<0xFF800000> : vector<8xf32>
    %33 = vector.multi_reduction <maximumf>, %32, %cst_23 [1] : vector<8x8xf32> to vector<8xf32>
    %34 = vector.shape_cast %33 : vector<8xf32> to vector<8x1xf32>
    %35 = vector.broadcast %34 : vector<8x1xf32> to vector<8x8xf32>
    %36 = arith.subf %32, %35 : vector<8x8xf32>
    %37 = math.exp %36 : vector<8x8xf32>
    %cst_24 = arith.constant dense<0.000000e+00> : vector<8xf32>
    %38 = vector.multi_reduction <add>, %37, %cst_24 [1] : vector<8x8xf32> to vector<8xf32>
    %39 = vector.shape_cast %38 : vector<8xf32> to vector<8x1xf32>
    %40 = tpu.reciprocal %39 {approx = true} : vector<8x1xf32> -> vector<8x1xf32>
    %41 = vector.broadcast %40 : vector<8x1xf32> to vector<8x8xf32>
    %42 = arith.mulf %37, %41 : vector<8x8xf32>
    %43 = vector.extract_strided_slice %29 {offsets = [0, 0], sizes = [8, 8], strides = [1, 1]} : vector<8x32xf32> to vector<8x8xf32>
    %cst_25 = arith.constant dense<0.000000e+00> : vector<8x8xf32>
    %44 = tpu.matmul %42, %43, %cst_25 {dimension_numbers = #tpu.dot_dimension_numbers<[1], [0], [0], [1], [0, 0, 1, 1], [], []>} : vector<8x8xf32>, vector<8x8xf32>, vector<8x8xf32> -> vector<8x8xf32>
    %45 = vector.extract_strided_slice %7 {offsets = [0, 0], sizes = [8, 32], strides = [1, 1]} : vector<32x32xf32> to vector<8x32xf32>
    %cst_26 = arith.constant dense<0.000000e+00> : vector<8x32xf32>
    %46 = tpu.matmul %44, %45, %cst_26 {dimension_numbers = #tpu.dot_dimension_numbers<[1], [0], [0], [1], [0, 0, 1, 1], [], []>} : vector<8x8xf32>, vector<8x32xf32>, vector<8x32xf32> -> vector<8x32xf32>
    %47 = arith.addf %21, %46 : vector<8x32xf32>
    %48 = vector.extract_strided_slice %25 {offsets = [0, 8], sizes = [8, 8], strides = [1, 1]} : vector<8x32xf32> to vector<8x8xf32>
    %49 = vector.extract_strided_slice %27 {offsets = [0, 8], sizes = [8, 8], strides = [1, 1]} : vector<8x32xf32> to vector<8x8xf32>
    %cst_27 = arith.constant dense<0.000000e+00> : vector<8x8xf32>
    %50 = tpu.matmul %48, %49, %cst_27 {dimension_numbers = #tpu.dot_dimension_numbers<[1], [1], [0], [0], [0, 0, 1, 0], [], []>} : vector<8x8xf32>, vector<8x8xf32>, vector<8x8xf32> -> vector<8x8xf32>
    %cst_28 = arith.constant dense<0xFF800000> : vector<8xf32>
    %51 = vector.multi_reduction <maximumf>, %50, %cst_28 [1] : vector<8x8xf32> to vector<8xf32>
    %52 = vector.shape_cast %51 : vector<8xf32> to vector<8x1xf32>
    %53 = vector.broadcast %52 : vector<8x1xf32> to vector<8x8xf32>
    %54 = arith.subf %50, %53 : vector<8x8xf32>
    %55 = math.exp %54 : vector<8x8xf32>
    %cst_29 = arith.constant dense<0.000000e+00> : vector<8xf32>
    %56 = vector.multi_reduction <add>, %55, %cst_29 [1] : vector<8x8xf32> to vector<8xf32>
    %57 = vector.shape_cast %56 : vector<8xf32> to vector<8x1xf32>
    %58 = tpu.reciprocal %57 {approx = true} : vector<8x1xf32> -> vector<8x1xf32>
    %59 = vector.broadcast %58 : vector<8x1xf32> to vector<8x8xf32>
    %60 = arith.mulf %55, %59 : vector<8x8xf32>
    %61 = vector.extract_strided_slice %29 {offsets = [0, 8], sizes = [8, 8], strides = [1, 1]} : vector<8x32xf32> to vector<8x8xf32>
    %cst_30 = arith.constant dense<0.000000e+00> : vector<8x8xf32>
    %62 = tpu.matmul %60, %61, %cst_30 {dimension_numbers = #tpu.dot_dimension_numbers<[1], [0], [0], [1], [0, 0, 1, 1], [], []>} : vector<8x8xf32>, vector<8x8xf32>, vector<8x8xf32> -> vector<8x8xf32>
    %63 = vector.extract_strided_slice %7 {offsets = [8, 0], sizes = [8, 32], strides = [1, 1]} : vector<32x32xf32> to vector<8x32xf32>
    %cst_31 = arith.constant dense<0.000000e+00> : vector<8x32xf32>
    %64 = tpu.matmul %62, %63, %cst_31 {dimension_numbers = #tpu.dot_dimension_numbers<[1], [0], [0], [1], [0, 0, 1, 1], [], []>} : vector<8x8xf32>, vector<8x32xf32>, vector<8x32xf32> -> vector<8x32xf32>
    %65 = arith.addf %47, %64 : vector<8x32xf32>
    %66 = vector.extract_strided_slice %25 {offsets = [0, 16], sizes = [8, 8], strides = [1, 1]} : vector<8x32xf32> to vector<8x8xf32>
    %67 = vector.extract_strided_slice %27 {offsets = [0, 16], sizes = [8, 8], strides = [1, 1]} : vector<8x32xf32> to vector<8x8xf32>
    %cst_32 = arith.constant dense<0.000000e+00> : vector<8x8xf32>
    %68 = tpu.matmul %66, %67, %cst_32 {dimension_numbers = #tpu.dot_dimension_numbers<[1], [1], [0], [0], [0, 0, 1, 0], [], []>} : vector<8x8xf32>, vector<8x8xf32>, vector<8x8xf32> -> vector<8x8xf32>
    %cst_33 = arith.constant dense<0xFF800000> : vector<8xf32>
    %69 = vector.multi_reduction <maximumf>, %68, %cst_33 [1] : vector<8x8xf32> to vector<8xf32>
    %70 = vector.shape_cast %69 : vector<8xf32> to vector<8x1xf32>
    %71 = vector.broadcast %70 : vector<8x1xf32> to vector<8x8xf32>
    %72 = arith.subf %68, %71 : vector<8x8xf32>
    %73 = math.exp %72 : vector<8x8xf32>
    %cst_34 = arith.constant dense<0.000000e+00> : vector<8xf32>
    %74 = vector.multi_reduction <add>, %73, %cst_34 [1] : vector<8x8xf32> to vector<8xf32>
    %75 = vector.shape_cast %74 : vector<8xf32> to vector<8x1xf32>
    %76 = tpu.reciprocal %75 {approx = true} : vector<8x1xf32> -> vector<8x1xf32>
    %77 = vector.broadcast %76 : vector<8x1xf32> to vector<8x8xf32>
    %78 = arith.mulf %73, %77 : vector<8x8xf32>
    %79 = vector.extract_strided_slice %29 {offsets = [0, 16], sizes = [8, 8], strides = [1, 1]} : vector<8x32xf32> to vector<8x8xf32>
    %cst_35 = arith.constant dense<0.000000e+00> : vector<8x8xf32>
    %80 = tpu.matmul %78, %79, %cst_35 {dimension_numbers = #tpu.dot_dimension_numbers<[1], [0], [0], [1], [0, 0, 1, 1], [], []>} : vector<8x8xf32>, vector<8x8xf32>, vector<8x8xf32> -> vector<8x8xf32>
    %81 = vector.extract_strided_slice %7 {offsets = [16, 0], sizes = [8, 32], strides = [1, 1]} : vector<32x32xf32> to vector<8x32xf32>
    %cst_36 = arith.constant dense<0.000000e+00> : vector<8x32xf32>
    %82 = tpu.matmul %80, %81, %cst_36 {dimension_numbers = #tpu.dot_dimension_numbers<[1], [0], [0], [1], [0, 0, 1, 1], [], []>} : vector<8x8xf32>, vector<8x32xf32>, vector<8x32xf32> -> vector<8x32xf32>
    %83 = arith.addf %65, %82 : vector<8x32xf32>
    %84 = vector.extract_strided_slice %25 {offsets = [0, 24], sizes = [8, 8], strides = [1, 1]} : vector<8x32xf32> to vector<8x8xf32>
    %85 = vector.extract_strided_slice %27 {offsets = [0, 24], sizes = [8, 8], strides = [1, 1]} : vector<8x32xf32> to vector<8x8xf32>
    %cst_37 = arith.constant dense<0.000000e+00> : vector<8x8xf32>
    %86 = tpu.matmul %84, %85, %cst_37 {dimension_numbers = #tpu.dot_dimension_numbers<[1], [1], [0], [0], [0, 0, 1, 0], [], []>} : vector<8x8xf32>, vector<8x8xf32>, vector<8x8xf32> -> vector<8x8xf32>
    %cst_38 = arith.constant dense<0xFF800000> : vector<8xf32>
    %87 = vector.multi_reduction <maximumf>, %86, %cst_38 [1] : vector<8x8xf32> to vector<8xf32>
    %88 = vector.shape_cast %87 : vector<8xf32> to vector<8x1xf32>
    %89 = vector.broadcast %88 : vector<8x1xf32> to vector<8x8xf32>
    %90 = arith.subf %86, %89 : vector<8x8xf32>
    %91 = math.exp %90 : vector<8x8xf32>
    %cst_39 = arith.constant dense<0.000000e+00> : vector<8xf32>
    %92 = vector.multi_reduction <add>, %91, %cst_39 [1] : vector<8x8xf32> to vector<8xf32>
    %93 = vector.shape_cast %92 : vector<8xf32> to vector<8x1xf32>
    %94 = tpu.reciprocal %93 {approx = true} : vector<8x1xf32> -> vector<8x1xf32>
    %95 = vector.broadcast %94 : vector<8x1xf32> to vector<8x8xf32>
    %96 = arith.mulf %91, %95 : vector<8x8xf32>
    %97 = vector.extract_strided_slice %29 {offsets = [0, 24], sizes = [8, 8], strides = [1, 1]} : vector<8x32xf32> to vector<8x8xf32>
    %cst_40 = arith.constant dense<0.000000e+00> : vector<8x8xf32>
    %98 = tpu.matmul %96, %97, %cst_40 {dimension_numbers = #tpu.dot_dimension_numbers<[1], [0], [0], [1], [0, 0, 1, 1], [], []>} : vector<8x8xf32>, vector<8x8xf32>, vector<8x8xf32> -> vector<8x8xf32>
    %99 = vector.extract_strided_slice %7 {offsets = [24, 0], sizes = [8, 32], strides = [1, 1]} : vector<32x32xf32> to vector<8x32xf32>
    %cst_41 = arith.constant dense<0.000000e+00> : vector<8x32xf32>
    %100 = tpu.matmul %98, %99, %cst_41 {dimension_numbers = #tpu.dot_dimension_numbers<[1], [0], [0], [1], [0, 0, 1, 1], [], []>} : vector<8x8xf32>, vector<8x32xf32>, vector<8x32xf32> -> vector<8x32xf32>
    %101 = arith.addf %83, %100 : vector<8x32xf32>
    %102 = arith.addf %23, %101 : vector<8x32xf32>
    %cst_42 = arith.constant dense<0.000000e+00> : vector<32xf32>
    %103 = vector.multi_reduction <add>, %102, %cst_42 [0] : vector<8x32xf32> to vector<32xf32>
    %104 = vector.shape_cast %103 : vector<32xf32> to vector<1x32xf32>
    %cst_43 = arith.constant 8.000000e+00 : f32
    %105 = vector.broadcast %cst_43 : f32 to vector<1x32xf32>
    %106 = arith.divf %104, %105 : vector<1x32xf32>
    %107 = vector.broadcast %106 : vector<1x32xf32> to vector<8x32xf32>
    %108 = arith.subf %102, %107 : vector<8x32xf32>
    %109 = arith.mulf %108, %108 : vector<8x32xf32>
    %cst_44 = arith.constant dense<0.000000e+00> : vector<32xf32>
    %110 = vector.multi_reduction <add>, %109, %cst_44 [0] : vector<8x32xf32> to vector<32xf32>
    %111 = vector.shape_cast %110 : vector<32xf32> to vector<1x32xf32>
    %cst_45 = arith.constant 8.000000e+00 : f32
    %112 = vector.broadcast %cst_45 : f32 to vector<1x32xf32>
    %113 = arith.divf %111, %112 : vector<1x32xf32>
    %cst_46 = arith.constant 9.99999974E-6 : f32
    %114 = vector.broadcast %cst_46 : f32 to vector<1x32xf32>
    %115 = arith.addf %113, %114 : vector<1x32xf32>
    %116 = math.rsqrt %115 : vector<1x32xf32>
    %117 = vector.broadcast %116 : vector<1x32xf32> to vector<8x32xf32>
    %118 = arith.mulf %108, %117 : vector<8x32xf32>
    %cst_47 = arith.constant 0.000000e+00 : f32
    %119 = vector.broadcast %cst_47 : f32 to vector<8x32xf32>
    %120 = arith.maximumf %118, %119 : vector<8x32xf32>
    %c1_i32 = arith.constant 1 : i32
    %cst_48 = arith.constant dense<0.000000e+00> : vector<8x32xf32>
    %121 = tpu.matmul %120, %4, %cst_48 {dimension_numbers = #tpu.dot_dimension_numbers<[1], [0], [0], [1], [0, 0, 1, 1], [], []>} : vector<8x32xf32>, vector<32x32xf32>, vector<8x32xf32> -> vector<8x32xf32>
    %122 = arith.addf %121, %12 : vector<8x32xf32>
    %cst_49 = arith.constant dense<0.000000e+00> : vector<8x32xf32>
    %123 = tpu.matmul %120, %5, %cst_49 {dimension_numbers = #tpu.dot_dimension_numbers<[1], [0], [0], [1], [0, 0, 1, 1], [], []>} : vector<8x32xf32>, vector<32x32xf32>, vector<8x32xf32> -> vector<8x32xf32>
    %124 = arith.addf %123, %15 : vector<8x32xf32>
    %cst_50 = arith.constant dense<0.000000e+00> : vector<8x32xf32>
    %125 = tpu.matmul %120, %6, %cst_50 {dimension_numbers = #tpu.dot_dimension_numbers<[1], [0], [0], [1], [0, 0, 1, 1], [], []>} : vector<8x32xf32>, vector<32x32xf32>, vector<8x32xf32> -> vector<8x32xf32>
    %126 = arith.addf %125, %18 : vector<8x32xf32>
    %127 = vector.extract_strided_slice %122 {offsets = [0, 0], sizes = [8, 8], strides = [1, 1]} : vector<8x32xf32> to vector<8x8xf32>
    %128 = vector.extract_strided_slice %124 {offsets = [0, 0], sizes = [8, 8], strides = [1, 1]} : vector<8x32xf32> to vector<8x8xf32>
    %cst_51 = arith.constant dense<0.000000e+00> : vector<8x8xf32>
    %129 = tpu.matmul %127, %128, %cst_51 {dimension_numbers = #tpu.dot_dimension_numbers<[1], [1], [0], [0], [0, 0, 1, 0], [], []>} : vector<8x8xf32>, vector<8x8xf32>, vector<8x8xf32> -> vector<8x8xf32>
    %cst_52 = arith.constant dense<0xFF800000> : vector<8xf32>
    %130 = vector.multi_reduction <maximumf>, %129, %cst_52 [1] : vector<8x8xf32> to vector<8xf32>
    %131 = vector.shape_cast %130 : vector<8xf32> to vector<8x1xf32>
    %132 = vector.broadcast %131 : vector<8x1xf32> to vector<8x8xf32>
    %133 = arith.subf %129, %132 : vector<8x8xf32>
    %134 = math.exp %133 : vector<8x8xf32>
    %cst_53 = arith.constant dense<0.000000e+00> : vector<8xf32>
    %135 = vector.multi_reduction <add>, %134, %cst_53 [1] : vector<8x8xf32> to vector<8xf32>
    %136 = vector.shape_cast %135 : vector<8xf32> to vector<8x1xf32>
    %137 = tpu.reciprocal %136 {approx = true} : vector<8x1xf32> -> vector<8x1xf32>
    %138 = vector.broadcast %137 : vector<8x1xf32> to vector<8x8xf32>
    %139 = arith.mulf %134, %138 : vector<8x8xf32>
    %140 = vector.extract_strided_slice %126 {offsets = [0, 0], sizes = [8, 8], strides = [1, 1]} : vector<8x32xf32> to vector<8x8xf32>
    %cst_54 = arith.constant dense<0.000000e+00> : vector<8x8xf32>
    %141 = tpu.matmul %139, %140, %cst_54 {dimension_numbers = #tpu.dot_dimension_numbers<[1], [0], [0], [1], [0, 0, 1, 1], [], []>} : vector<8x8xf32>, vector<8x8xf32>, vector<8x8xf32> -> vector<8x8xf32>
    %142 = vector.extract_strided_slice %7 {offsets = [0, 0], sizes = [8, 32], strides = [1, 1]} : vector<32x32xf32> to vector<8x32xf32>
    %cst_55 = arith.constant dense<0.000000e+00> : vector<8x32xf32>
    %143 = tpu.matmul %141, %142, %cst_55 {dimension_numbers = #tpu.dot_dimension_numbers<[1], [0], [0], [1], [0, 0, 1, 1], [], []>} : vector<8x8xf32>, vector<8x32xf32>, vector<8x32xf32> -> vector<8x32xf32>
    %144 = arith.addf %21, %143 : vector<8x32xf32>
    %145 = vector.extract_strided_slice %122 {offsets = [0, 8], sizes = [8, 8], strides = [1, 1]} : vector<8x32xf32> to vector<8x8xf32>
    %146 = vector.extract_strided_slice %124 {offsets = [0, 8], sizes = [8, 8], strides = [1, 1]} : vector<8x32xf32> to vector<8x8xf32>
    %cst_56 = arith.constant dense<0.000000e+00> : vector<8x8xf32>
    %147 = tpu.matmul %145, %146, %cst_56 {dimension_numbers = #tpu.dot_dimension_numbers<[1], [1], [0], [0], [0, 0, 1, 0], [], []>} : vector<8x8xf32>, vector<8x8xf32>, vector<8x8xf32> -> vector<8x8xf32>
    %cst_57 = arith.constant dense<0xFF800000> : vector<8xf32>
    %148 = vector.multi_reduction <maximumf>, %147, %cst_57 [1] : vector<8x8xf32> to vector<8xf32>
    %149 = vector.shape_cast %148 : vector<8xf32> to vector<8x1xf32>
    %150 = vector.broadcast %149 : vector<8x1xf32> to vector<8x8xf32>
    %151 = arith.subf %147, %150 : vector<8x8xf32>
    %152 = math.exp %151 : vector<8x8xf32>
    %cst_58 = arith.constant dense<0.000000e+00> : vector<8xf32>
    %153 = vector.multi_reduction <add>, %152, %cst_58 [1] : vector<8x8xf32> to vector<8xf32>
    %154 = vector.shape_cast %153 : vector<8xf32> to vector<8x1xf32>
    %155 = tpu.reciprocal %154 {approx = true} : vector<8x1xf32> -> vector<8x1xf32>
    %156 = vector.broadcast %155 : vector<8x1xf32> to vector<8x8xf32>
    %157 = arith.mulf %152, %156 : vector<8x8xf32>
    %158 = vector.extract_strided_slice %126 {offsets = [0, 8], sizes = [8, 8], strides = [1, 1]} : vector<8x32xf32> to vector<8x8xf32>
    %cst_59 = arith.constant dense<0.000000e+00> : vector<8x8xf32>
    %159 = tpu.matmul %157, %158, %cst_59 {dimension_numbers = #tpu.dot_dimension_numbers<[1], [0], [0], [1], [0, 0, 1, 1], [], []>} : vector<8x8xf32>, vector<8x8xf32>, vector<8x8xf32> -> vector<8x8xf32>
    %160 = vector.extract_strided_slice %7 {offsets = [8, 0], sizes = [8, 32], strides = [1, 1]} : vector<32x32xf32> to vector<8x32xf32>
    %cst_60 = arith.constant dense<0.000000e+00> : vector<8x32xf32>
    %161 = tpu.matmul %159, %160, %cst_60 {dimension_numbers = #tpu.dot_dimension_numbers<[1], [0], [0], [1], [0, 0, 1, 1], [], []>} : vector<8x8xf32>, vector<8x32xf32>, vector<8x32xf32> -> vector<8x32xf32>
    %162 = arith.addf %144, %161 : vector<8x32xf32>
    %163 = vector.extract_strided_slice %122 {offsets = [0, 16], sizes = [8, 8], strides = [1, 1]} : vector<8x32xf32> to vector<8x8xf32>
    %164 = vector.extract_strided_slice %124 {offsets = [0, 16], sizes = [8, 8], strides = [1, 1]} : vector<8x32xf32> to vector<8x8xf32>
    %cst_61 = arith.constant dense<0.000000e+00> : vector<8x8xf32>
    %165 = tpu.matmul %163, %164, %cst_61 {dimension_numbers = #tpu.dot_dimension_numbers<[1], [1], [0], [0], [0, 0, 1, 0], [], []>} : vector<8x8xf32>, vector<8x8xf32>, vector<8x8xf32> -> vector<8x8xf32>
    %cst_62 = arith.constant dense<0xFF800000> : vector<8xf32>
    %166 = vector.multi_reduction <maximumf>, %165, %cst_62 [1] : vector<8x8xf32> to vector<8xf32>
    %167 = vector.shape_cast %166 : vector<8xf32> to vector<8x1xf32>
    %168 = vector.broadcast %167 : vector<8x1xf32> to vector<8x8xf32>
    %169 = arith.subf %165, %168 : vector<8x8xf32>
    %170 = math.exp %169 : vector<8x8xf32>
    %cst_63 = arith.constant dense<0.000000e+00> : vector<8xf32>
    %171 = vector.multi_reduction <add>, %170, %cst_63 [1] : vector<8x8xf32> to vector<8xf32>
    %172 = vector.shape_cast %171 : vector<8xf32> to vector<8x1xf32>
    %173 = tpu.reciprocal %172 {approx = true} : vector<8x1xf32> -> vector<8x1xf32>
    %174 = vector.broadcast %173 : vector<8x1xf32> to vector<8x8xf32>
    %175 = arith.mulf %170, %174 : vector<8x8xf32>
    %176 = vector.extract_strided_slice %126 {offsets = [0, 16], sizes = [8, 8], strides = [1, 1]} : vector<8x32xf32> to vector<8x8xf32>
    %cst_64 = arith.constant dense<0.000000e+00> : vector<8x8xf32>
    %177 = tpu.matmul %175, %176, %cst_64 {dimension_numbers = #tpu.dot_dimension_numbers<[1], [0], [0], [1], [0, 0, 1, 1], [], []>} : vector<8x8xf32>, vector<8x8xf32>, vector<8x8xf32> -> vector<8x8xf32>
    %178 = vector.extract_strided_slice %7 {offsets = [16, 0], sizes = [8, 32], strides = [1, 1]} : vector<32x32xf32> to vector<8x32xf32>
    %cst_65 = arith.constant dense<0.000000e+00> : vector<8x32xf32>
    %179 = tpu.matmul %177, %178, %cst_65 {dimension_numbers = #tpu.dot_dimension_numbers<[1], [0], [0], [1], [0, 0, 1, 1], [], []>} : vector<8x8xf32>, vector<8x32xf32>, vector<8x32xf32> -> vector<8x32xf32>
    %180 = arith.addf %162, %179 : vector<8x32xf32>
    %181 = vector.extract_strided_slice %122 {offsets = [0, 24], sizes = [8, 8], strides = [1, 1]} : vector<8x32xf32> to vector<8x8xf32>
    %182 = vector.extract_strided_slice %124 {offsets = [0, 24], sizes = [8, 8], strides = [1, 1]} : vector<8x32xf32> to vector<8x8xf32>
    %cst_66 = arith.constant dense<0.000000e+00> : vector<8x8xf32>
    %183 = tpu.matmul %181, %182, %cst_66 {dimension_numbers = #tpu.dot_dimension_numbers<[1], [1], [0], [0], [0, 0, 1, 0], [], []>} : vector<8x8xf32>, vector<8x8xf32>, vector<8x8xf32> -> vector<8x8xf32>
    %cst_67 = arith.constant dense<0xFF800000> : vector<8xf32>
    %184 = vector.multi_reduction <maximumf>, %183, %cst_67 [1] : vector<8x8xf32> to vector<8xf32>
    %185 = vector.shape_cast %184 : vector<8xf32> to vector<8x1xf32>
    %186 = vector.broadcast %185 : vector<8x1xf32> to vector<8x8xf32>
    %187 = arith.subf %183, %186 : vector<8x8xf32>
    %188 = math.exp %187 : vector<8x8xf32>
    %cst_68 = arith.constant dense<0.000000e+00> : vector<8xf32>
    %189 = vector.multi_reduction <add>, %188, %cst_68 [1] : vector<8x8xf32> to vector<8xf32>
    %190 = vector.shape_cast %189 : vector<8xf32> to vector<8x1xf32>
    %191 = tpu.reciprocal %190 {approx = true} : vector<8x1xf32> -> vector<8x1xf32>
    %192 = vector.broadcast %191 : vector<8x1xf32> to vector<8x8xf32>
    %193 = arith.mulf %188, %192 : vector<8x8xf32>
    %194 = vector.extract_strided_slice %126 {offsets = [0, 24], sizes = [8, 8], strides = [1, 1]} : vector<8x32xf32> to vector<8x8xf32>
    %cst_69 = arith.constant dense<0.000000e+00> : vector<8x8xf32>
    %195 = tpu.matmul %193, %194, %cst_69 {dimension_numbers = #tpu.dot_dimension_numbers<[1], [0], [0], [1], [0, 0, 1, 1], [], []>} : vector<8x8xf32>, vector<8x8xf32>, vector<8x8xf32> -> vector<8x8xf32>
    %196 = vector.extract_strided_slice %7 {offsets = [24, 0], sizes = [8, 32], strides = [1, 1]} : vector<32x32xf32> to vector<8x32xf32>
    %cst_70 = arith.constant dense<0.000000e+00> : vector<8x32xf32>
    %197 = tpu.matmul %195, %196, %cst_70 {dimension_numbers = #tpu.dot_dimension_numbers<[1], [0], [0], [1], [0, 0, 1, 1], [], []>} : vector<8x8xf32>, vector<8x32xf32>, vector<8x32xf32> -> vector<8x32xf32>
    %198 = arith.addf %180, %197 : vector<8x32xf32>
    %199 = arith.addf %120, %198 : vector<8x32xf32>
    %cst_71 = arith.constant dense<0.000000e+00> : vector<32xf32>
    %200 = vector.multi_reduction <add>, %199, %cst_71 [0] : vector<8x32xf32> to vector<32xf32>
    %201 = vector.shape_cast %200 : vector<32xf32> to vector<1x32xf32>
    %cst_72 = arith.constant 8.000000e+00 : f32
    %202 = vector.broadcast %cst_72 : f32 to vector<1x32xf32>
    %203 = arith.divf %201, %202 : vector<1x32xf32>
    %204 = vector.broadcast %203 : vector<1x32xf32> to vector<8x32xf32>
    %205 = arith.subf %199, %204 : vector<8x32xf32>
    %206 = arith.mulf %205, %205 : vector<8x32xf32>
    %cst_73 = arith.constant dense<0.000000e+00> : vector<32xf32>
    %207 = vector.multi_reduction <add>, %206, %cst_73 [0] : vector<8x32xf32> to vector<32xf32>
    %208 = vector.shape_cast %207 : vector<32xf32> to vector<1x32xf32>
    %cst_74 = arith.constant 8.000000e+00 : f32
    %209 = vector.broadcast %cst_74 : f32 to vector<1x32xf32>
    %210 = arith.divf %208, %209 : vector<1x32xf32>
    %cst_75 = arith.constant 9.99999974E-6 : f32
    %211 = vector.broadcast %cst_75 : f32 to vector<1x32xf32>
    %212 = arith.addf %210, %211 : vector<1x32xf32>
    %213 = math.rsqrt %212 : vector<1x32xf32>
    %214 = vector.broadcast %213 : vector<1x32xf32> to vector<8x32xf32>
    %215 = arith.mulf %205, %214 : vector<8x32xf32>
    %cst_76 = arith.constant 0.000000e+00 : f32
    %216 = vector.broadcast %cst_76 : f32 to vector<8x32xf32>
    %217 = arith.maximumf %215, %216 : vector<8x32xf32>
    %c0_77 = arith.constant 0 : index
    %c0_78 = arith.constant 0 : index
    %c0_79 = arith.constant 0 : index
    %218 = vector.load %arg10[%c0_77, %c0_78, %c0_79] : memref<1x8x32xf32, #tpu.memory_space<vmem>>, vector<1x8x32xf32>
    %219 = vector.shape_cast %218 : vector<1x8x32xf32> to vector<8x32xf32>
    %220 = vector.shape_cast %217 : vector<8x32xf32> to vector<1x8x32xf32>
    tpu.vector_store %arg10[%c0_77, %c0_78, %c0_79], %220 {strides = array<i32>} : memref<1x8x32xf32, #tpu.memory_space<vmem>>, vector<1x8x32xf32>,
    return
  }
  func.func @transform_0(%arg0: i32) -> (i32, i32, i32) {
    %c0_i32 = arith.constant 0 : i32
    %c0_i32_0 = arith.constant 0 : i32
    %c0_i32_1 = arith.constant 0 : i32
    return %arg0, %c0_i32, %c0_i32_0 : i32, i32, i32
  }
  func.func @transform_1(%arg0: i32) -> (i32, i32) {
    %c0_i32 = arith.constant 0 : i32
    %c0_i32_0 = arith.constant 0 : i32
    %c0_i32_1 = arith.constant 0 : i32
    return %c0_i32, %c0_i32_0 : i32, i32
  }
  func.func @transform_2(%arg0: i32) -> (i32, i32) {
    %c0_i32 = arith.constant 0 : i32
    %c0_i32_0 = arith.constant 0 : i32
    %c0_i32_1 = arith.constant 0 : i32
    return %c0_i32, %c0_i32_0 : i32, i32
  }
  func.func @transform_3(%arg0: i32) -> (i32, i32) {
    %c0_i32 = arith.constant 0 : i32
    %c0_i32_0 = arith.constant 0 : i32
    %c0_i32_1 = arith.constant 0 : i32
    return %c0_i32, %c0_i32_0 : i32, i32
  }
  func.func @transform_4(%arg0: i32) -> (i32, i32) {
    %c0_i32 = arith.constant 0 : i32
    %c0_i32_0 = arith.constant 0 : i32
    %c0_i32_1 = arith.constant 0 : i32
    return %c0_i32, %c0_i32_0 : i32, i32
  }
  func.func @transform_5(%arg0: i32) -> (i32, i32) {
    %c0_i32 = arith.constant 0 : i32
    %c0_i32_0 = arith.constant 0 : i32
    %c0_i32_1 = arith.constant 0 : i32
    return %c0_i32, %c0_i32_0 : i32, i32
  }
  func.func @transform_6(%arg0: i32) -> (i32, i32) {
    %c0_i32 = arith.constant 0 : i32
    %c0_i32_0 = arith.constant 0 : i32
    %c0_i32_1 = arith.constant 0 : i32
    return %c0_i32, %c0_i32_0 : i32, i32
  }
  func.func @transform_7(%arg0: i32) -> (i32, i32) {
    %c0_i32 = arith.constant 0 : i32
    %c0_i32_0 = arith.constant 0 : i32
    %c0_i32_1 = arith.constant 0 : i32
    return %c0_i32, %c0_i32_0 : i32, i32
  }
  func.func @transform_8(%arg0: i32) -> (i32, i32) {
    %c0_i32 = arith.constant 0 : i32
    %c0_i32_0 = arith.constant 0 : i32
    %c0_i32_1 = arith.constant 0 : i32
    return %c0_i32, %c0_i32_0 : i32, i32
  }
  func.func @transform_9(%arg0: i32) -> (i32, i32, i32) {
    %c0_i32 = arith.constant 0 : i32
    %c0_i32_0 = arith.constant 0 : i32
    %c0_i32_1 = arith.constant 0 : i32
    return %arg0, %c0_i32, %c0_i32_0 : i32, i32, i32
  }
}

</mosaic_0001>

<llo_original>
// kernel: tpu_custom_call.1
$region0: #{tpu_custom_call.1}
  #allocation0 [shape = 'u32[]', space=smem, size = 0x4, offset = 0x4, fixed_abs, tag = 'smem constant byte address 0x4 - core index']
  #allocation1 [shape = 'u32[72,128]{1,0:T(1,128)}', space=vmem, size = 0x9000, scoped, tag = 'internal scratch']
  %s0 = inlined_call_operand.hbm [shape: f32[2,8,32], index: 0, kind: input, shape index: {}]
  %s1 = inlined_call_operand.hbm [shape: f32[32,32], index: 1, kind: input, shape index: {}]
  %s2 = inlined_call_operand.vmem [shape: f32[1,32], index: 2, kind: input, shape index: {}]
  %s3 = inlined_call_operand.hbm [shape: f32[32,32], index: 3, kind: input, shape index: {}]
  %s4 = inlined_call_operand.vmem [shape: f32[1,32], index: 4, kind: input, shape index: {}]
  %s5 = inlined_call_operand.hbm [shape: f32[32,32], index: 5, kind: input, shape index: {}]
  %s6 = inlined_call_operand.vmem [shape: f32[1,32], index: 6, kind: input, shape index: {}]
  %s7 = inlined_call_operand.hbm [shape: f32[32,32], index: 7, kind: input, shape index: {}]
  %s8 = inlined_call_operand.vmem [shape: f32[1,32], index: 8, kind: input, shape index: {}]
  %s9 = inlined_call_operand.hbm [shape: f32[2,8,32], index: 9, kind: output, shape index: {}]
  %s10 = sld [smem:[#allocation0]]
  $region89: #{tpu_custom_call.1} parent=0
    _
  %s12 = ssub.s32 1, %s10
  %s13 = scalar_select 0, %s12, %s10
  $region1: #{tpu_custom_call.1} parent=0
    #allocation2 [shape = 'u8[8192]{0}', space=vmem, size = 0x2000, scoped, tag = 'input window, operand 0']
    #allocation3 [shape = 's32[2]{0}', space=sflag, size = 0x8, scoped, tag = 'scoped memory for tpu_custom_call.1']
    #allocation4 [shape = 's32[2]{0}', space=sflag, size = 0x8, scoped, tag = 'scoped memory for tpu_custom_call.1']
    #allocation5 [shape = 'u8[16384]{0}', space=vmem, size = 0x4000, scoped, tag = 'input window, operand 1, single buffered']
    #allocation6 [shape = 's32[1]{0}', space=sflag, size = 0x4, scoped, tag = 'scoped memory for tpu_custom_call.1']
    #allocation7 [shape = 'u8[16384]{0}', space=vmem, size = 0x4000, scoped, tag = 'input window, operand 3, single buffered']
    #allocation8 [shape = 'u8[16384]{0}', space=vmem, size = 0x4000, scoped, tag = 'input window, operand 5, single buffered']
    #allocation9 [shape = 's32[1]{0}', space=sflag, size = 0x4, scoped, tag = 'scoped memory for tpu_custom_call.1']
    #allocation10 [shape = 'u8[16384]{0}', space=vmem, size = 0x4000, scoped, tag = 'input window, operand 7, single buffered']
    #allocation11 [shape = 'u8[8192]{0}', space=vmem, size = 0x2000, scoped, tag = 'output window, operand 0']
    %14 = vsyncpa [#allocation3], 0
    %s15 = scalar_lea.sflag [#allocation3], 1
    %16 = vsyncpa %s15, 0
    %17 = vsyncpa [#allocation6], 0
    %18 = vsyncpa [#allocation9], 0
    %19 = vsyncpa [#allocation4], 0
    %s20 = scalar_lea.sflag [#allocation4], 1
    %21 = vsyncpa %s20, 0
    loop: start=0, step=1, limit=4
    $region2: #{tpu_custom_call.1} parent=1 // loop_pre_header
      _
    $region3: #{tpu_custom_call.1} parent=1 // loop_header
      %s23 = sphi 0, %s27
      %p24 = scmp.ge.s32.totalorder %s23, 4
      %s33 = sphi 0, %s35
      %s36 = sphi 0, %s33
      %s37 = sphi 0, %s36
      %s53 = sphi 0, %s37
      %s57 = sphi 0, %s57
      %s59 = sphi 0, %s57
      %s60 = sphi 0, %s59
      %s74 = sphi 0, %s60
      %s78 = sphi 0, %s78
      %s80 = sphi 0, %s78
      %s81 = sphi 0, %s80
      %s95 = sphi 0, %s81
      %s99 = sphi 0, %s99
      %s101 = sphi 0, %s99
      %s102 = sphi 0, %s101
      %s116 = sphi 0, %s102
      %s120 = sphi 0, %s120
      %s122 = sphi 0, %s120
      %s123 = sphi 0, %s122
      %s137 = sphi 0, %s123
      %s141 = sphi 0, %s141
      %s143 = sphi 0, %s141
      %s144 = sphi 0, %s143
      %s158 = sphi 0, %s144
      %s162 = sphi 0, %s162
      %s164 = sphi 0, %s162
      %s165 = sphi 0, %s164
      %s179 = sphi 0, %s165
      %s183 = sphi 0, %s183
      %s185 = sphi 0, %s183
      %s186 = sphi 0, %s185
      %s200 = sphi 0, %s186
      %s204 = sphi 0, %s204
      %s206 = sphi 0, %s204
      %s207 = sphi 0, %s206
      %s221 = sphi 0, %s207
      %s227 = sphi 0, %s229
      %s230 = sphi 0, %s227
      %s231 = sphi 0, %s230
      %s247 = sphi 0, %s231
    $region4: #{tpu_custom_call.1} parent=1 // loop_header_branch
      %26 = sbr.rel (%p24) target = $region8
    $region5: #{tpu_custom_call.1} parent=1 // loop_body
      %s28 = ssub.s32 %s23, 1
      %s29 = ssub.s32 %s23, 2
      %s30 = sadd.s32 %s23, 1
      %s31 = ssub.s32 %s23, %s30
      %p32 = scmp.eq.s32.totalorder %s31, 0
      %s34 = sadd.s32 %s33, 1
      %s35 = scalar_select %p32, %s33, %s34
      %p38 = pneg %p32
      %p39 = scmp.eq.s32.totalorder %s23, 1
      %p40 = por %p38, %p39
      %p41 = scmp.ne.s32.totalorder %s33, %s36
      %p42 = scmp.eq.s32.totalorder %s23, 0
      %p43 = por %p41, %p42
      %p44 = scmp.ne.s32.totalorder %s33, %s36
      %p45 = scmp.eq.s32.totalorder %s28, 1
      %p46 = por %p44, %p45
      %p47 = scmp.ne.s32.totalorder %s36, %s37
      %p48 = scmp.eq.s32.totalorder %s28, 0
      %p49 = por %p47, %p48
      %p50 = scmp.ne.s32.totalorder %s36, %s37
      %p51 = scmp.eq.s32.totalorder %s29, 1
      %p52 = por %p50, %p51
      %p54 = scmp.ne.s32.totalorder %s37, %s53
      %p55 = scmp.eq.s32.totalorder %s29, 0
      %p56 = por %p54, %p55
      %s58 = sadd.s32 %s57, 1
      %p61 = scmp.eq.s32.totalorder %s23, 1
      %p62 = scmp.ne.s32.totalorder %s57, %s59
      %p63 = scmp.eq.s32.totalorder %s23, 0
      %p64 = por %p62, %p63
      %p65 = scmp.ne.s32.totalorder %s57, %s59
      %p66 = scmp.eq.s32.totalorder %s28, 1
      %p67 = por %p65, %p66
      %p68 = scmp.ne.s32.totalorder %s59, %s60
      %p69 = scmp.eq.s32.totalorder %s28, 0
      %p70 = por %p68, %p69
      %p71 = scmp.ne.s32.totalorder %s59, %s60
      %p72 = scmp.eq.s32.totalorder %s29, 1
      %p73 = por %p71, %p72
      %p75 = scmp.ne.s32.totalorder %s60, %s74
      %p76 = scmp.eq.s32.totalorder %s29, 0
      %p77 = por %p75, %p76
      %s79 = sadd.s32 %s78, 1
      %p82 = scmp.eq.s32.totalorder %s23, 1
      %p83 = scmp.ne.s32.totalorder %s78, %s80
      %p84 = scmp.eq.s32.totalorder %s23, 0
      %p85 = por %p83, %p84
      %p86 = scmp.ne.s32.totalorder %s78, %s80
      %p87 = scmp.eq.s32.totalorder %s28, 1
      %p88 = por %p86, %p87
      %p89 = scmp.ne.s32.totalorder %s80, %s81
      %p90 = scmp.eq.s32.totalorder %s28, 0
      %p91 = por %p89, %p90
      %p92 = scmp.ne.s32.totalorder %s80, %s81
      %p93 = scmp.eq.s32.totalorder %s29, 1
      %p94 = por %p92, %p93
      %p96 = scmp.ne.s32.totalorder %s81, %s95
      %p97 = scmp.eq.s32.totalorder %s29, 0
      %p98 = por %p96, %p97
      %s100 = sadd.s32 %s99, 1
      %p103 = scmp.eq.s32.totalorder %s23, 1
      %p104 = scmp.ne.s32.totalorder %s99, %s101
      %p105 = scmp.eq.s32.totalorder %s23, 0
      %p106 = por %p104, %p105
      %p107 = scmp.ne.s32.totalorder %s99, %s101
      %p108 = scmp.eq.s32.totalorder %s28, 1
      %p109 = por %p107, %p108
      %p110 = scmp.ne.s32.totalorder %s101, %s102
      %p111 = scmp.eq.s32.totalorder %s28, 0
      %p112 = por %p110, %p111
      %p113 = scmp.ne.s32.totalorder %s101, %s102
      %p114 = scmp.eq.s32.totalorder %s29, 1
      %p115 = por %p113, %p114
      %p117 = scmp.ne.s32.totalorder %s102, %s116
      %p118 = scmp.eq.s32.totalorder %s29, 0
      %p119 = por %p117, %p118
      %s121 = sadd.s32 %s120, 1
      %p124 = scmp.eq.s32.totalorder %s23, 1
      %p125 = scmp.ne.s32.totalorder %s120, %s122
      %p126 = scmp.eq.s32.totalorder %s23, 0
      %p127 = por %p125, %p126
      %p128 = scmp.ne.s32.totalorder %s120, %s122
      %p129 = scmp.eq.s32.totalorder %s28, 1
      %p130 = por %p128, %p129
      %p131 = scmp.ne.s32.totalorder %s122, %s123
      %p132 = scmp.eq.s32.totalorder %s28, 0
      %p133 = por %p131, %p132
      %p134 = scmp.ne.s32.totalorder %s122, %s123
      %p135 = scmp.eq.s32.totalorder %s29, 1
      %p136 = por %p134, %p135
      %p138 = scmp.ne.s32.totalorder %s123, %s137
      %p139 = scmp.eq.s32.totalorder %s29, 0
      %p140 = por %p138, %p139
      %s142 = sadd.s32 %s141, 1
      %p145 = scmp.eq.s32.totalorder %s23, 1
      %p146 = scmp.ne.s32.totalorder %s141, %s143
      %p147 = scmp.eq.s32.totalorder %s23, 0
      %p148 = por %p146, %p147
      %p149 = scmp.ne.s32.totalorder %s141, %s143
      %p150 = scmp.eq.s32.totalorder %s28, 1
      %p151 = por %p149, %p150
      %p152 = scmp.ne.s32.totalorder %s143, %s144
      %p153 = scmp.eq.s32.totalorder %s28, 0
      %p154 = por %p152, %p153
      %p155 = scmp.ne.s32.totalorder %s143, %s144
      %p156 = scmp.eq.s32.totalorder %s29, 1
      %p157 = por %p155, %p156
      %p159 = scmp.ne.s32.totalorder %s144, %s158
      %p160 = scmp.eq.s32.totalorder %s29, 0
      %p161 = por %p159, %p160
      %s163 = sadd.s32 %s162, 1
      %p166 = scmp.eq.s32.totalorder %s23, 1
      %p167 = scmp.ne.s32.totalorder %s162, %s164
      %p168 = scmp.eq.s32.totalorder %s23, 0
      %p169 = por %p167, %p168
      %p170 = scmp.ne.s32.totalorder %s162, %s164
      %p171 = scmp.eq.s32.totalorder %s28, 1
      %p172 = por %p170, %p171
      %p173 = scmp.ne.s32.totalorder %s164, %s165
      %p174 = scmp.eq.s32.totalorder %s28, 0
      %p175 = por %p173, %p174
      %p176 = scmp.ne.s32.totalorder %s164, %s165
      %p177 = scmp.eq.s32.totalorder %s29, 1
      %p178 = por %p176, %p177
      %p180 = scmp.ne.s32.totalorder %s165, %s179
      %p181 = scmp.eq.s32.totalorder %s29, 0
      %p182 = por %p180, %p181
      %s184 = sadd.s32 %s183, 1
      %p187 = scmp.eq.s32.totalorder %s23, 1
      %p188 = scmp.ne.s32.totalorder %s183, %s185
      %p189 = scmp.eq.s32.totalorder %s23, 0
      %p190 = por %p188, %p189
      %p191 = scmp.ne.s32.totalorder %s183, %s185
      %p192 = scmp.eq.s32.totalorder %s28, 1
      %p193 = por %p191, %p192
      %p194 = scmp.ne.s32.totalorder %s185, %s186
      %p195 = scmp.eq.s32.totalorder %s28, 0
      %p196 = por %p194, %p195
      %p197 = scmp.ne.s32.totalorder %s185, %s186
      %p198 = scmp.eq.s32.totalorder %s29, 1
      %p199 = por %p197, %p198
      %p201 = scmp.ne.s32.totalorder %s186, %s200
      %p202 = scmp.eq.s32.totalorder %s29, 0
      %p203 = por %p201, %p202
      %s205 = sadd.s32 %s204, 1
      %p208 = scmp.eq.s32.totalorder %s23, 1
      %p209 = scmp.ne.s32.totalorder %s204, %s206
      %p210 = scmp.eq.s32.totalorder %s23, 0
      %p211 = por %p209, %p210
      %p212 = scmp.ne.s32.totalorder %s204, %s206
      %p213 = scmp.eq.s32.totalorder %s28, 1
      %p214 = por %p212, %p213
      %p215 = scmp.ne.s32.totalorder %s206, %s207
      %p216 = scmp.eq.s32.totalorder %s28, 0
      %p217 = por %p215, %p216
      %p218 = scmp.ne.s32.totalorder %s206, %s207
      %p219 = scmp.eq.s32.totalorder %s29, 1
      %p220 = por %p218, %p219
      %p222 = scmp.ne.s32.totalorder %s207, %s221
      %p223 = scmp.eq.s32.totalorder %s29, 0
      %p224 = por %p222, %p223
      %s225 = ssub.s32 %s23, %s30
      %p226 = scmp.eq.s32.totalorder %s225, 0
      %s228 = sadd.s32 %s227, 1
      %s229 = scalar_select %p226, %s227, %s228
      %p232 = pneg %p226
      %p233 = scmp.eq.s32.totalorder %s23, 1
      %p234 = por %p232, %p233
      %p235 = scmp.ne.s32.totalorder %s227, %s230
      %p236 = scmp.eq.s32.totalorder %s23, 0
      %p237 = por %p235, %p236
      %p238 = scmp.ne.s32.totalorder %s227, %s230
      %p239 = scmp.eq.s32.totalorder %s28, 1
      %p240 = por %p238, %p239
      %p241 = scmp.ne.s32.totalorder %s230, %s231
      %p242 = scmp.eq.s32.totalorder %s28, 0
      %p243 = por %p241, %p242
      %p244 = scmp.ne.s32.totalorder %s230, %s231
      %p245 = scmp.eq.s32.totalorder %s29, 1
      %p246 = por %p244, %p245
      %p248 = scmp.ne.s32.totalorder %s231, %s247
      %p249 = scmp.eq.s32.totalorder %s29, 0
      %p250 = por %p248, %p249
      %p251 = scmp.le.s32.totalorder 1, %s23
      %p252 = scmp.lt.s32.totalorder %s23, 3
      %p253 = pnand %p251, %p252
      %p254 = pneg %p253
      // Predicated region
      $region9: #{tpu_custom_call.1} parent=5 // pred_check
        _
      $region10: #{tpu_custom_call.1} parent=5 // pred_check_branch
        %256 = sbr.rel (%p253) target = $region12
      $region11: #{tpu_custom_call.1} parent=5 // pred_region
        %s257 = ssub.s32 %s23, 1
        // Predicated region
        $region13: #{tpu_custom_call.1} parent=11 // pred_check
          %p258 = pneg %p70
        $region14: #{tpu_custom_call.1} parent=11 // pred_check_branch
          %260 = sbr.rel (%p258) target = $region16
        $region15: #{tpu_custom_call.1} parent=11 // pred_region
          %262 = vsyncadd [#allocation6], 0
          %s263 = sshll.u32 %s1, 4
          %s264 = int_to_ptr.hbm [resolvable:$true] %s263
          %s265 = sshll.u32 [#allocation5], 4
          %s266 = int_to_ptr.vmem [resolvable:$true] %s265
          %271 = dma.hbm_to_vmem [thread:$0]  %s264, 512, %s266, [#allocation6], 128, 128, 8
        $region16: #{tpu_custom_call.1} parent=11 // pred_fallthru
          _
        // Predicated region
        $region17: #{tpu_custom_call.1} parent=11 // pred_check
          %p272 = pneg %p91
        $region18: #{tpu_custom_call.1} parent=11 // pred_check_branch
          %274 = sbr.rel (%p272) target = $region20
        $region19: #{tpu_custom_call.1} parent=11 // pred_region
          _
        $region20: #{tpu_custom_call.1} parent=11 // pred_fallthru
          _
        // Predicated region
        $region21: #{tpu_custom_call.1} parent=11 // pred_check
          %p275 = pneg %p112
        $region22: #{tpu_custom_call.1} parent=11 // pred_check_branch
          %277 = sbr.rel (%p275) target = $region24
        $region23: #{tpu_custom_call.1} parent=11 // pred_region
          %279 = vsyncadd [#allocation6], 0
          %s280 = sshll.u32 %s3, 4
          %s281 = int_to_ptr.hbm [resolvable:$true] %s280
          %s282 = sshll.u32 [#allocation7], 4
          %s283 = int_to_ptr.vmem [resolvable:$true] %s282
          %288 = dma.hbm_to_vmem [thread:$0]  %s281, 512, %s283, [#allocation6], 128, 128, 8
        $region24: #{tpu_custom_call.1} parent=11 // pred_fallthru
          _
        // Predicated region
        $region25: #{tpu_custom_call.1} parent=11 // pred_check
          %p289 = pneg %p133
        $region26: #{tpu_custom_call.1} parent=11 // pred_check_branch
          %291 = sbr.rel (%p289) target = $region28
        $region27: #{tpu_custom_call.1} parent=11 // pred_region
          _
        $region28: #{tpu_custom_call.1} parent=11 // pred_fallthru
          _
        // Predicated region
        $region29: #{tpu_custom_call.1} parent=11 // pred_check
          %p292 = pneg %p154
        $region30: #{tpu_custom_call.1} parent=11 // pred_check_branch
          %294 = sbr.rel (%p292) target = $region32
        $region31: #{tpu_custom_call.1} parent=11 // pred_region
          %296 = vsyncadd [#allocation9], 0
          %s297 = sshll.u32 %s5, 4
          %s298 = int_to_ptr.hbm [resolvable:$true] %s297
          %s299 = sshll.u32 [#allocation8], 4
          %s300 = int_to_ptr.vmem [resolvable:$true] %s299
          %305 = dma.hbm_to_vmem [thread:$0]  %s298, 512, %s300, [#allocation9], 128, 128, 8
        $region32: #{tpu_custom_call.1} parent=11 // pred_fallthru
          _
        // Predicated region
        $region33: #{tpu_custom_call.1} parent=11 // pred_check
          %p306 = pneg %p175
        $region34: #{tpu_custom_call.1} parent=11 // pred_check_branch
          %308 = sbr.rel (%p306) target = $region36
        $region35: #{tpu_custom_call.1} parent=11 // pred_region
          _
        $region36: #{tpu_custom_call.1} parent=11 // pred_fallthru
          _
        // Predicated region
        $region37: #{tpu_custom_call.1} parent=11 // pred_check
          %p309 = pneg %p196
        $region38: #{tpu_custom_call.1} parent=11 // pred_check_branch
          %311 = sbr.rel (%p309) target = $region40
        $region39: #{tpu_custom_call.1} parent=11 // pred_region
          %313 = vsyncadd [#allocation9], 0
          %s314 = sshll.u32 %s7, 4
          %s315 = int_to_ptr.hbm [resolvable:$true] %s314
          %s316 = sshll.u32 [#allocation10], 4
          %s317 = int_to_ptr.vmem [resolvable:$true] %s316
          %322 = dma.hbm_to_vmem [thread:$0]  %s315, 512, %s317, [#allocation9], 128, 128, 8
        $region40: #{tpu_custom_call.1} parent=11 // pred_fallthru
          _
        // Predicated region
        $region41: #{tpu_custom_call.1} parent=11 // pred_check
          %p323 = pneg %p217
        $region42: #{tpu_custom_call.1} parent=11 // pred_check_branch
          %325 = sbr.rel (%p323) target = $region44
        $region43: #{tpu_custom_call.1} parent=11 // pred_region
          _
        $region44: #{tpu_custom_call.1} parent=11 // pred_fallthru
          _
      $region12: #{tpu_custom_call.1} parent=5 // pred_fallthru
        _
      %p326 = scmp.lt.s32.totalorder %s23, 2
      // Predicated region
      $region45: #{tpu_custom_call.1} parent=5 // pred_check
        %p327 = pneg %p326
      $region46: #{tpu_custom_call.1} parent=5 // pred_check_branch
        %329 = sbr.rel (%p327) target = $region48
      $region47: #{tpu_custom_call.1} parent=5 // pred_region
        // Predicated region
        $region49: #{tpu_custom_call.1} parent=47 // pred_check
          %p330 = pneg %p43
        $region50: #{tpu_custom_call.1} parent=47 // pred_check_branch
          %332 = sbr.rel (%p330) target = $region52
        $region51: #{tpu_custom_call.1} parent=47 // pred_region
          %s333 = sand.u32 %s33, 1
          %s334 = scalar_lea.sflag [#allocation3], %s333
          %s335 = sand.u32 %s33, 1
          %s336 = smul.addr %s335, 8
          %s337 = scalar_lea.vmem [#allocation2], %s336
          %339 = vsyncadd %s334, 0
          %s340 = smul.addr %s23, 8
          %s341 = scalar_lea.hbm %s0, %s340
          %s343 = sshll.u32 %s341, 4
          %s344 = int_to_ptr.hbm [resolvable:$true] %s343
          %s345 = sshll.u32 %s337, 4
          %s346 = int_to_ptr.vmem [resolvable:$true] %s345
          %348 = dma.hbm_to_vmem [thread:$0]  %s344, 128, %s346, %s334
        $region52: #{tpu_custom_call.1} parent=47 // pred_fallthru
          _
      $region48: #{tpu_custom_call.1} parent=5 // pred_fallthru
        _
      %p349 = scmp.le.s32.totalorder 1, %s23
      %p350 = scmp.lt.s32.totalorder %s23, 3
      %p351 = pnand %p349, %p350
      %p352 = pneg %p351
      // Predicated region
      $region53: #{tpu_custom_call.1} parent=5 // pred_check
        _
      $region54: #{tpu_custom_call.1} parent=5 // pred_check_branch
        %354 = sbr.rel (%p351) target = $region56
      $region55: #{tpu_custom_call.1} parent=5 // pred_region
        %s355 = ssub.s32 %s23, 1
        %s356 = sand.u32 %s36, 1
        %s357 = scalar_lea.sflag [#allocation3], %s356
        %s358 = sand.u32 %s36, 1
        %s359 = smul.addr %s358, 8
        %s360 = scalar_lea.vmem [#allocation2], %s359
        // Predicated region
        $region57: #{tpu_custom_call.1} parent=55 // pred_check
          %p361 = pneg %p49
        $region58: #{tpu_custom_call.1} parent=55 // pred_check_branch
          %363 = sbr.rel (%p361) target = $region60
        $region59: #{tpu_custom_call.1} parent=55 // pred_region
          %365 = dma.done %s357, 128
        $region60: #{tpu_custom_call.1} parent=55 // pred_fallthru
          _
        // Predicated region
        $region61: #{tpu_custom_call.1} parent=55 // pred_check
          %p366 = pneg %p70
        $region62: #{tpu_custom_call.1} parent=55 // pred_check_branch
          %368 = sbr.rel (%p366) target = $region64
        $region63: #{tpu_custom_call.1} parent=55 // pred_region
          %370 = dma.done [#allocation6], 512
        $region64: #{tpu_custom_call.1} parent=55 // pred_fallthru
          _
        // Predicated region
        $region65: #{tpu_custom_call.1} parent=55 // pred_check
          %p371 = pneg %p112
        $region66: #{tpu_custom_call.1} parent=55 // pred_check_branch
          %373 = sbr.rel (%p371) target = $region68
        $region67: #{tpu_custom_call.1} parent=55 // pred_region
          %375 = dma.done [#allocation6], 512
        $region68: #{tpu_custom_call.1} parent=55 // pred_fallthru
          _
        // Predicated region
        $region69: #{tpu_custom_call.1} parent=55 // pred_check
          %p376 = pneg %p154
        $region70: #{tpu_custom_call.1} parent=55 // pred_check_branch
          %378 = sbr.rel (%p376) target = $region72
        $region71: #{tpu_custom_call.1} parent=55 // pred_region
          %380 = dma.done [#allocation9], 512
        $region72: #{tpu_custom_call.1} parent=55 // pred_fallthru
          _
        // Predicated region
        $region73: #{tpu_custom_call.1} parent=55 // pred_check
          %p381 = pneg %p196
        $region74: #{tpu_custom_call.1} parent=55 // pred_check_branch
          %383 = sbr.rel (%p381) target = $region76
        $region75: #{tpu_custom_call.1} parent=55 // pred_region
          %385 = dma.done [#allocation9], 512
        $region76: #{tpu_custom_call.1} parent=55 // pred_fallthru
          _
        %s386 = sand.u32 %s36, 1
        %s387 = scalar_lea.sflag [#allocation3], %s386
        %s388 = sand.u32 %s36, 1
        %s389 = smul.addr %s388, 8
        %s390 = scalar_lea.vmem [#allocation2], %s389
        %p391 = pneg %p49
        %p392 = pneg %p46
        %p393 = pneg %p70
        %p394 = pneg %p67
        %p395 = pneg %p91
        %p396 = pneg %p88
        %p397 = pneg %p112
        %p398 = pneg %p109
        %p399 = pneg %p133
        %p400 = pneg %p130
        %p401 = pneg %p154
        %p402 = pneg %p151
        %p403 = pneg %p175
        %p404 = pneg %p172
        %p405 = pneg %p196
        %p406 = pneg %p193
        %p407 = pneg %p217
        %p408 = pneg %p214
        %p409 = pneg %p243
        %p410 = pneg %p240
        %s411 = sand.u32 %s230, 1
        %s412 = scalar_lea.sflag [#allocation4], %s411
        %s413 = sand.u32 %s230, 1
        %s414 = smul.addr %s413, 8
        %s415 = scalar_lea.vmem [#allocation11], %s414
        %v416 = vld [vmem:[#allocation5] sm:$0xff]
        %v417 = vld [vmem:[#allocation5 + $0x8] sm:$0xff]
        %v418 = vld [vmem:[#allocation5 + $0x10] sm:$0xff]
        %v419 = vld [vmem:[#allocation5 + $0x18] sm:$0xff]
        %v420 = vmul.f32 %v416, 0.35355338
        %v421 = vmul.f32 %v417, 0.35355338
        %v422 = vmul.f32 %v418, 0.35355338
        %v423 = vmul.f32 %v419, 0.35355338
        %v424 = vld [vmem:[#allocation7] sm:$0xff]
        %v425 = vld [vmem:[#allocation7 + $0x8] sm:$0xff]
        %v426 = vld [vmem:[#allocation7 + $0x10] sm:$0xff]
        %v427 = vld [vmem:[#allocation7 + $0x18] sm:$0xff]
        %v428 = vld [vmem:[#allocation8] sm:$0xff]
        %v429 = vld [vmem:[#allocation8 + $0x8] sm:$0xff]
        %v430 = vld [vmem:[#allocation8 + $0x10] sm:$0xff]
        %v431 = vld [vmem:[#allocation8 + $0x18] sm:$0xff]
        %v432 = vld [vmem:[#allocation10] sm:$0xff]
        %v433 = vld [vmem:[#allocation10 + $0x8] sm:$0xff]
        %v434 = vld [vmem:[#allocation10 + $0x10] sm:$0xff]
        %v435 = vld [vmem:[#allocation10 + $0x18] sm:$0xff]
        %v436 = vld [vmem:[%s2] sm:$0x1]
        %v437 = vmul.f32 %v436, 0.35355338
        %v439 = vperm.slane %v437, 0
        %v441 = vld [vmem:[%s4] sm:$0x1]
        %v443 = vperm.slane %v441, 0
        %v445 = vld [vmem:[%s6] sm:$0x1]
        %v447 = vperm.slane %v445, 0
        %v449 = vld [vmem:[%s8] sm:$0x1]
        %v451 = vperm.slane %v449, 0
        %v453 = vld [vmem:[%s360] sm:$0xff]
        %vm454 = vcmask 261120
        %v456 = vsel %vm454, %v453, 0
        %458 = vmatpush.msra.mxu0 0.0
        %459 = vmatpush.msra.mxu0 0.0
        %460 = vmatpush.msra.mxu0 0.0
        %461 = vmatpush.msra.mxu0 0.0
        %462 = vmatpush.msra.mxu0 0.0
        %463 = vmatpush.msra.mxu0 0.0
        %464 = vmatpush.msra.mxu0 0.0
        %465 = vmatpush.msra.mxu0 0.0
        %466 = vmatpush.msra.mxu0 0.0
        %467 = vmatpush.msra.mxu0 0.0
        %468 = vmatpush.msra.mxu0 0.0
        %469 = vmatpush.msra.mxu0 0.0
        %470 = vmatpush.msra.mxu0 %v423
        %471 = vmatpush.msra.mxu0 %v422
        %472 = vmatpush.msra.mxu0 %v421
        %473 = vmatpush.msra.mxu0 %v420
        %474 = vmatmul.f32.gmra.mxu0 %v456
        %v475 = vpop.f32.mrf.mxu0
        %v476 = vadd.f32 %v439, %v475
        %477 = vdwg.mxu0
        %478 = vmatpush.msra.mxu0 0.0
        %479 = vmatpush.msra.mxu0 0.0
        %480 = vmatpush.msra.mxu0 0.0
        %481 = vmatpush.msra.mxu0 0.0
        %482 = vmatpush.msra.mxu0 0.0
        %483 = vmatpush.msra.mxu0 0.0
        %484 = vmatpush.msra.mxu0 0.0
        %485 = vmatpush.msra.mxu0 0.0
        %486 = vmatpush.msra.mxu0 0.0
        %487 = vmatpush.msra.mxu0 0.0
        %488 = vmatpush.msra.mxu0 0.0
        %489 = vmatpush.msra.mxu0 0.0
        %490 = vmatpush.msra.mxu0 %v427
        %491 = vmatpush.msra.mxu0 %v426
        %492 = vmatpush.msra.mxu0 %v425
        %493 = vmatpush.msra.mxu0 %v424
        %494 = vmatmul.f32.gmra.mxu0 %v456
        %v495 = vpop.f32.mrf.mxu0
        %v496 = vadd.f32 %v443, %v495
        %497 = vdwg.mxu0
        %498 = vmatpush.msra.mxu0 0.0
        %499 = vmatpush.msra.mxu0 0.0
        %500 = vmatpush.msra.mxu0 0.0
        %501 = vmatpush.msra.mxu0 0.0
        %502 = vmatpush.msra.mxu0 0.0
        %503 = vmatpush.msra.mxu0 0.0
        %504 = vmatpush.msra.mxu0 0.0
        %505 = vmatpush.msra.mxu0 0.0
        %506 = vmatpush.msra.mxu0 0.0
        %507 = vmatpush.msra.mxu0 0.0
        %508 = vmatpush.msra.mxu0 0.0
        %509 = vmatpush.msra.mxu0 0.0
        %510 = vmatpush.msra.mxu0 %v431
        %511 = vmatpush.msra.mxu0 %v430
        %512 = vmatpush.msra.mxu0 %v429
        %513 = vmatpush.msra.mxu0 %v428
        %514 = vmatmul.f32.gmra.mxu0 %v456
        %v515 = vpop.f32.mrf.mxu0
        %v516 = vadd.f32 %v447, %v515
        %517 = vdwg.mxu0
        %vm518 = vcmask 64512
        %v520 = vsel %vm518, %v476, 0
        %v523 = vsel %vm518, %v496, 0
        %525 = vmatpush.xpose.msra.mxu0 0.0
        %526 = vmatpush.xpose.msra.mxu0 0.0
        %527 = vmatpush.xpose.msra.mxu0 0.0
        %528 = vmatpush.xpose.msra.mxu0 0.0
        %529 = vmatpush.xpose.msra.mxu0 0.0
        %530 = vmatpush.xpose.msra.mxu0 0.0
        %531 = vmatpush.xpose.msra.mxu0 0.0
        %532 = vmatpush.xpose.msra.mxu0 0.0
        %533 = vmatpush.xpose.msra.mxu0 0.0
        %534 = vmatpush.xpose.msra.mxu0 0.0
        %535 = vmatpush.xpose.msra.mxu0 0.0
        %536 = vmatpush.xpose.msra.mxu0 0.0
        %537 = vmatpush.xpose.msra.mxu0 0.0
        %538 = vmatpush.xpose.msra.mxu0 0.0
        %539 = vmatpush.xpose.msra.mxu0 0.0
        %540 = vmatpush.xpose.msra.mxu0 %v523
        %541 = vmatmul.f32.gmra.mxu0 %v520
        %v542 = vpop.f32.mrf.mxu0
        %v543 = vadd.f32 0.0, %v542
        %544 = vdwg.mxu0
        %v545 = vsel %vm518, %v543, -inf
        %546 = vmax.xlane.f32.xlu0 %v545
        %v547 = vpop.xlane.xlu0 %546
        %v548 = vsub.f32 %v543, %v547
        %v549 = vmul.f32 %v548, 1.442695
        %v550 = vpow.pop %v549
        %v551 = vsel %vm518, %v550, 0.0
        %552 = vadd.xlane.f32.xlu0 %v551
        %v553 = vpop.xlane.xlu0 %552
        %v554 = vrcp.pop %v553
        %v555 = vmul.f32 %v550, %v554
        %v557 = vsel %vm518, %v555, 0
        %559 = vmatpush.msra.mxu0 0.0
        %560 = vmatpush.msra.mxu0 0.0
        %561 = vmatpush.msra.mxu0 0.0
        %562 = vmatpush.msra.mxu0 0.0
        %563 = vmatpush.msra.mxu0 0.0
        %564 = vmatpush.msra.mxu0 0.0
        %565 = vmatpush.msra.mxu0 0.0
        %566 = vmatpush.msra.mxu0 0.0
        %567 = vmatpush.msra.mxu0 0.0
        %568 = vmatpush.msra.mxu0 0.0
        %569 = vmatpush.msra.mxu0 0.0
        %570 = vmatpush.msra.mxu0 0.0
        %571 = vmatpush.msra.mxu0 0.0
        %572 = vmatpush.msra.mxu0 0.0
        %573 = vmatpush.msra.mxu0 0.0
        %574 = vmatpush.msra.mxu0 %v516
        %575 = vmatmul.f32.gmra.mxu0 %v557
        %v576 = vpop.f32.mrf.mxu0
        %v577 = vadd.f32 0.0, %v576
        %578 = vdwg.mxu0
        %v580 = vsel %vm518, %v577, 0
        %582 = vmatpush.msra.mxu0 0.0
        %583 = vmatpush.msra.mxu0 0.0
        %584 = vmatpush.msra.mxu0 0.0
        %585 = vmatpush.msra.mxu0 0.0
        %586 = vmatpush.msra.mxu0 0.0
        %587 = vmatpush.msra.mxu0 0.0
        %588 = vmatpush.msra.mxu0 0.0
        %589 = vmatpush.msra.mxu0 0.0
        %590 = vmatpush.msra.mxu0 0.0
        %591 = vmatpush.msra.mxu0 0.0
        %592 = vmatpush.msra.mxu0 0.0
        %593 = vmatpush.msra.mxu0 0.0
        %594 = vmatpush.msra.mxu0 0.0
        %595 = vmatpush.msra.mxu0 0.0
        %596 = vmatpush.msra.mxu0 0.0
        %597 = vmatpush.msra.mxu0 %v432
        %598 = vmatmul.f32.gmra.mxu0 %v580
        %v599 = vpop.f32.mrf.mxu0
        %v600 = vadd.f32 0.0, %v599
        %601 = vdwg.mxu0
        %v602 = vadd.f32 %v451, %v600
        %603 = vrot.lane.b32.xlu0 %v476, 120
        %v604 = vpop.permute.xlu0 %603
        %605 = vrot.lane.b32.xlu0 %v496, 120
        %v606 = vpop.permute.xlu0 %605
        %v607 = vsel %vm518, %v604, 0
        %v609 = vsel %vm518, %v606, 0
        %611 = vmatpush.xpose.msra.mxu0 0.0
        %612 = vmatpush.xpose.msra.mxu0 0.0
        %613 = vmatpush.xpose.msra.mxu0 0.0
        %614 = vmatpush.xpose.msra.mxu0 0.0
        %615 = vmatpush.xpose.msra.mxu0 0.0
        %616 = vmatpush.xpose.msra.mxu0 0.0
        %617 = vmatpush.xpose.msra.mxu0 0.0
        %618 = vmatpush.xpose.msra.mxu0 0.0
        %619 = vmatpush.xpose.msra.mxu0 0.0
        %620 = vmatpush.xpose.msra.mxu0 0.0
        %621 = vmatpush.xpose.msra.mxu0 0.0
        %622 = vmatpush.xpose.msra.mxu0 0.0
        %623 = vmatpush.xpose.msra.mxu0 0.0
        %624 = vmatpush.xpose.msra.mxu0 0.0
        %625 = vmatpush.xpose.msra.mxu0 0.0
        %626 = vmatpush.xpose.msra.mxu0 %v609
        %627 = vmatmul.f32.gmra.mxu0 %v607
        %v628 = vpop.f32.mrf.mxu0
        %v629 = vadd.f32 0.0, %v628
        %630 = vdwg.mxu0
        %v631 = vsel %vm518, %v629, -inf
        %632 = vmax.xlane.f32.xlu0 %v631
        %v633 = vpop.xlane.xlu0 %632
        %v634 = vsub.f32 %v629, %v633
        %v635 = vmul.f32 %v634, 1.442695
        %v636 = vpow.pop %v635
        %v637 = vsel %vm518, %v636, 0.0
        %638 = vadd.xlane.f32.xlu0 %v637
        %v639 = vpop.xlane.xlu0 %638
        %v640 = vrcp.pop %v639
        %v641 = vmul.f32 %v636, %v640
        %643 = vrot.lane.b32.xlu0 %v516, 120
        %v644 = vpop.permute.xlu0 %643
        %v647 = vsel %vm518, %v641, 0
        %649 = vmatpush.msra.mxu0 0.0
        %650 = vmatpush.msra.mxu0 0.0
        %651 = vmatpush.msra.mxu0 0.0
        %652 = vmatpush.msra.mxu0 0.0
        %653 = vmatpush.msra.mxu0 0.0
        %654 = vmatpush.msra.mxu0 0.0
        %655 = vmatpush.msra.mxu0 0.0
        %656 = vmatpush.msra.mxu0 0.0
        %657 = vmatpush.msra.mxu0 0.0
        %658 = vmatpush.msra.mxu0 0.0
        %659 = vmatpush.msra.mxu0 0.0
        %660 = vmatpush.msra.mxu0 0.0
        %661 = vmatpush.msra.mxu0 0.0
        %662 = vmatpush.msra.mxu0 0.0
        %663 = vmatpush.msra.mxu0 0.0
        %664 = vmatpush.msra.mxu0 %v644
        %665 = vmatmul.f32.gmra.mxu0 %v647
        %v666 = vpop.f32.mrf.mxu0
        %v667 = vadd.f32 0.0, %v666
        %668 = vdwg.mxu0
        %v670 = vsel %vm518, %v667, 0
        %672 = vmatpush.msra.mxu0 0.0
        %673 = vmatpush.msra.mxu0 0.0
        %674 = vmatpush.msra.mxu0 0.0
        %675 = vmatpush.msra.mxu0 0.0
        %676 = vmatpush.msra.mxu0 0.0
        %677 = vmatpush.msra.mxu0 0.0
        %678 = vmatpush.msra.mxu0 0.0
        %679 = vmatpush.msra.mxu0 0.0
        %680 = vmatpush.msra.mxu0 0.0
        %681 = vmatpush.msra.mxu0 0.0
        %682 = vmatpush.msra.mxu0 0.0
        %683 = vmatpush.msra.mxu0 0.0
        %684 = vmatpush.msra.mxu0 0.0
        %685 = vmatpush.msra.mxu0 0.0
        %686 = vmatpush.msra.mxu0 0.0
        %687 = vmatpush.msra.mxu0 %v433
        %688 = vmatmul.f32.gmra.mxu0 %v670
        %v689 = vpop.f32.mrf.mxu0
        %v690 = vadd.f32 0.0, %v689
        %691 = vdwg.mxu0
        %v692 = vadd.f32 %v602, %v690
        %693 = vrot.lane.b32.xlu0 %v476, 112
        %v694 = vpop.permute.xlu0 %693
        %695 = vrot.lane.b32.xlu0 %v496, 112
        %v696 = vpop.permute.xlu0 %695
        %v697 = vsel %vm518, %v694, 0
        %v699 = vsel %vm518, %v696, 0
        %701 = vmatpush.xpose.msra.mxu0 0.0
        %702 = vmatpush.xpose.msra.mxu0 0.0
        %703 = vmatpush.xpose.msra.mxu0 0.0
        %704 = vmatpush.xpose.msra.mxu0 0.0
        %705 = vmatpush.xpose.msra.mxu0 0.0
        %706 = vmatpush.xpose.msra.mxu0 0.0
        %707 = vmatpush.xpose.msra.mxu0 0.0
        %708 = vmatpush.xpose.msra.mxu0 0.0
        %709 = vmatpush.xpose.msra.mxu0 0.0
        %710 = vmatpush.xpose.msra.mxu0 0.0
        %711 = vmatpush.xpose.msra.mxu0 0.0
        %712 = vmatpush.xpose.msra.mxu0 0.0
        %713 = vmatpush.xpose.msra.mxu0 0.0
        %714 = vmatpush.xpose.msra.mxu0 0.0
        %715 = vmatpush.xpose.msra.mxu0 0.0
        %716 = vmatpush.xpose.msra.mxu0 %v699
        %717 = vmatmul.f32.gmra.mxu0 %v697
        %v718 = vpop.f32.mrf.mxu0
        %v719 = vadd.f32 0.0, %v718
        %720 = vdwg.mxu0
        %v721 = vsel %vm518, %v719, -inf
        %722 = vmax.xlane.f32.xlu0 %v721
        %v723 = vpop.xlane.xlu0 %722
        %v724 = vsub.f32 %v719, %v723
        %v725 = vmul.f32 %v724, 1.442695
        %v726 = vpow.pop %v725
        %v727 = vsel %vm518, %v726, 0.0
        %728 = vadd.xlane.f32.xlu0 %v727
        %v729 = vpop.xlane.xlu0 %728
        %v730 = vrcp.pop %v729
        %v731 = vmul.f32 %v726, %v730
        %732 = vrot.lane.b32.xlu0 %v516, 112
        %v733 = vpop.permute.xlu0 %732
        %v736 = vsel %vm518, %v731, 0
        %738 = vmatpush.msra.mxu0 0.0
        %739 = vmatpush.msra.mxu0 0.0
        %740 = vmatpush.msra.mxu0 0.0
        %741 = vmatpush.msra.mxu0 0.0
        %742 = vmatpush.msra.mxu0 0.0
        %743 = vmatpush.msra.mxu0 0.0
        %744 = vmatpush.msra.mxu0 0.0
        %745 = vmatpush.msra.mxu0 0.0
        %746 = vmatpush.msra.mxu0 0.0
        %747 = vmatpush.msra.mxu0 0.0
        %748 = vmatpush.msra.mxu0 0.0
        %749 = vmatpush.msra.mxu0 0.0
        %750 = vmatpush.msra.mxu0 0.0
        %751 = vmatpush.msra.mxu0 0.0
        %752 = vmatpush.msra.mxu0 0.0
        %753 = vmatpush.msra.mxu0 %v733
        %754 = vmatmul.f32.gmra.mxu0 %v736
        %v755 = vpop.f32.mrf.mxu0
        %v756 = vadd.f32 0.0, %v755
        %757 = vdwg.mxu0
        %v759 = vsel %vm518, %v756, 0
        %761 = vmatpush.msra.mxu0 0.0
        %762 = vmatpush.msra.mxu0 0.0
        %763 = vmatpush.msra.mxu0 0.0
        %764 = vmatpush.msra.mxu0 0.0
        %765 = vmatpush.msra.mxu0 0.0
        %766 = vmatpush.msra.mxu0 0.0
        %767 = vmatpush.msra.mxu0 0.0
        %768 = vmatpush.msra.mxu0 0.0
        %769 = vmatpush.msra.mxu0 0.0
        %770 = vmatpush.msra.mxu0 0.0
        %771 = vmatpush.msra.mxu0 0.0
        %772 = vmatpush.msra.mxu0 0.0
        %773 = vmatpush.msra.mxu0 0.0
        %774 = vmatpush.msra.mxu0 0.0
        %775 = vmatpush.msra.mxu0 0.0
        %776 = vmatpush.msra.mxu0 %v434
        %777 = vmatmul.f32.gmra.mxu0 %v759
        %v778 = vpop.f32.mrf.mxu0
        %v779 = vadd.f32 0.0, %v778
        %780 = vdwg.mxu0
        %v781 = vadd.f32 %v692, %v779
        %782 = vrot.lane.b32.xlu0 %v476, 104
        %v783 = vpop.permute.xlu0 %782
        %784 = vrot.lane.b32.xlu0 %v496, 104
        %v785 = vpop.permute.xlu0 %784
        %v786 = vsel %vm518, %v783, 0
        %v788 = vsel %vm518, %v785, 0
        %790 = vmatpush.xpose.msra.mxu0 0.0
        %791 = vmatpush.xpose.msra.mxu0 0.0
        %792 = vmatpush.xpose.msra.mxu0 0.0
        %793 = vmatpush.xpose.msra.mxu0 0.0
        %794 = vmatpush.xpose.msra.mxu0 0.0
        %795 = vmatpush.xpose.msra.mxu0 0.0
        %796 = vmatpush.xpose.msra.mxu0 0.0
        %797 = vmatpush.xpose.msra.mxu0 0.0
        %798 = vmatpush.xpose.msra.mxu0 0.0
        %799 = vmatpush.xpose.msra.mxu0 0.0
        %800 = vmatpush.xpose.msra.mxu0 0.0
        %801 = vmatpush.xpose.msra.mxu0 0.0
        %802 = vmatpush.xpose.msra.mxu0 0.0
        %803 = vmatpush.xpose.msra.mxu0 0.0
        %804 = vmatpush.xpose.msra.mxu0 0.0
        %805 = vmatpush.xpose.msra.mxu0 %v788
        %806 = vmatmul.f32.gmra.mxu0 %v786
        %v807 = vpop.f32.mrf.mxu0
        %v808 = vadd.f32 0.0, %v807
        %809 = vdwg.mxu0
        %v810 = vsel %vm518, %v808, -inf
        %811 = vmax.xlane.f32.xlu0 %v810
        %v812 = vpop.xlane.xlu0 %811
        %v813 = vsub.f32 %v808, %v812
        %v814 = vmul.f32 %v813, 1.442695
        %v815 = vpow.pop %v814
        %v816 = vsel %vm518, %v815, 0.0
        %817 = vadd.xlane.f32.xlu0 %v816
        %v818 = vpop.xlane.xlu0 %817
        %v819 = vrcp.pop %v818
        %v820 = vmul.f32 %v815, %v819
        %821 = vrot.lane.b32.xlu0 %v516, 104
        %v822 = vpop.permute.xlu0 %821
        %v825 = vsel %vm518, %v820, 0
        %827 = vmatpush.msra.mxu0 0.0
        %828 = vmatpush.msra.mxu0 0.0
        %829 = vmatpush.msra.mxu0 0.0
        %830 = vmatpush.msra.mxu0 0.0
        %831 = vmatpush.msra.mxu0 0.0
        %832 = vmatpush.msra.mxu0 0.0
        %833 = vmatpush.msra.mxu0 0.0
        %834 = vmatpush.msra.mxu0 0.0
        %835 = vmatpush.msra.mxu0 0.0
        %836 = vmatpush.msra.mxu0 0.0
        %837 = vmatpush.msra.mxu0 0.0
        %838 = vmatpush.msra.mxu0 0.0
        %839 = vmatpush.msra.mxu0 0.0
        %840 = vmatpush.msra.mxu0 0.0
        %841 = vmatpush.msra.mxu0 0.0
        %842 = vmatpush.msra.mxu0 %v822
        %843 = vmatmul.f32.gmra.mxu0 %v825
        %v844 = vpop.f32.mrf.mxu0
        %v845 = vadd.f32 0.0, %v844
        %846 = vdwg.mxu0
        %v848 = vsel %vm518, %v845, 0
        %850 = vmatpush.msra.mxu0 0.0
        %851 = vmatpush.msra.mxu0 0.0
        %852 = vmatpush.msra.mxu0 0.0
        %853 = vmatpush.msra.mxu0 0.0
        %854 = vmatpush.msra.mxu0 0.0
        %855 = vmatpush.msra.mxu0 0.0
        %856 = vmatpush.msra.mxu0 0.0
        %857 = vmatpush.msra.mxu0 0.0
        %858 = vmatpush.msra.mxu0 0.0
        %859 = vmatpush.msra.mxu0 0.0
        %860 = vmatpush.msra.mxu0 0.0
        %861 = vmatpush.msra.mxu0 0.0
        %862 = vmatpush.msra.mxu0 0.0
        %863 = vmatpush.msra.mxu0 0.0
        %864 = vmatpush.msra.mxu0 0.0
        %865 = vmatpush.msra.mxu0 %v435
        %866 = vmatmul.f32.gmra.mxu0 %v848
        %v867 = vpop.f32.mrf.mxu0
        %v868 = vadd.f32 0.0, %v867
        %869 = vdwg.mxu0
        %v870 = vadd.f32 %v781, %v868
        %v871 = vadd.f32 %v453, %v870
        %v872 = vsel %vm454, %v871, 0.0
        %v873 = vrot.slane %v872, 4
        %v874 = vadd.f32 %v872, %v873
        %v875 = vrot.slane %v874, 2
        %v876 = vadd.f32 %v874, %v875
        %v877 = vrot.slane %v876, 1
        %v878 = vadd.f32 %v876, %v877
        %v879 = vrcp.pop 8.0
        %v880 = vmul.f32 8.0, %v879
        %v881 = vsub.f32 1.0, %v880
        %v882 = vmul.f32 %v879, %v881
        %v883 = vadd.f32 %v879, %v882
        %vm884 = vweird.f32 %v879
        %v885 = vsel %vm884, %v879, %v883
        %v886 = vmul.f32 %v878, %v885
        %v887 = vsub.f32 %v871, %v886
        %v888 = vmul.f32 %v887, %v887
        %v889 = vsel %vm454, %v888, 0.0
        %v890 = vrot.slane %v889, 4
        %v891 = vadd.f32 %v889, %v890
        %v892 = vrot.slane %v891, 2
        %v893 = vadd.f32 %v891, %v892
        %v894 = vrot.slane %v893, 1
        %v895 = vadd.f32 %v893, %v894
        %v896 = vmul.f32 %v895, %v885
        %v897 = vadd.f32 %v896, 1e-05
        %v898 = vrsqrt.pop %v897
        %v899 = vmul.f32 %v898, %v897
        %v900 = vmul.f32 %v899, %v898
        %v901 = vmul.f32 0.5, %v900
        %v902 = vsub.f32 1.5, %v901
        %v903 = vmul.f32 %v898, %v902
        %vm904 = vweird.f32 %v897
        %vm905 = vweird.f32 %v898
        %vm906 = vmor %vm904, %vm905
        %v907 = vsel %vm906, %v898, %v903
        %v908 = vmul.f32 %v887, %v907
        %v909 = vmax.f32 %v908, 0.0
        %v911 = vsel %vm454, %v909, 0
        %913 = vmatpush.msra.mxu0 0.0
        %914 = vmatpush.msra.mxu0 0.0
        %915 = vmatpush.msra.mxu0 0.0
        %916 = vmatpush.msra.mxu0 0.0
        %917 = vmatpush.msra.mxu0 0.0
        %918 = vmatpush.msra.mxu0 0.0
        %919 = vmatpush.msra.mxu0 0.0
        %920 = vmatpush.msra.mxu0 0.0
        %921 = vmatpush.msra.mxu0 0.0
        %922 = vmatpush.msra.mxu0 0.0
        %923 = vmatpush.msra.mxu0 0.0
        %924 = vmatpush.msra.mxu0 0.0
        %925 = vmatpush.msra.mxu0 %v423
        %926 = vmatpush.msra.mxu0 %v422
        %927 = vmatpush.msra.mxu0 %v421
        %928 = vmatpush.msra.mxu0 %v420
        %929 = vmatmul.f32.gmra.mxu0 %v911
        %v930 = vpop.f32.mrf.mxu0
        %v931 = vadd.f32 %v439, %v930
        %932 = vdwg.mxu0
        %933 = vmatpush.msra.mxu0 0.0
        %934 = vmatpush.msra.mxu0 0.0
        %935 = vmatpush.msra.mxu0 0.0
        %936 = vmatpush.msra.mxu0 0.0
        %937 = vmatpush.msra.mxu0 0.0
        %938 = vmatpush.msra.mxu0 0.0
        %939 = vmatpush.msra.mxu0 0.0
        %940 = vmatpush.msra.mxu0 0.0
        %941 = vmatpush.msra.mxu0 0.0
        %942 = vmatpush.msra.mxu0 0.0
        %943 = vmatpush.msra.mxu0 0.0
        %944 = vmatpush.msra.mxu0 0.0
        %945 = vmatpush.msra.mxu0 %v427
        %946 = vmatpush.msra.mxu0 %v426
        %947 = vmatpush.msra.mxu0 %v425
        %948 = vmatpush.msra.mxu0 %v424
        %949 = vmatmul.f32.gmra.mxu0 %v911
        %v950 = vpop.f32.mrf.mxu0
        %v951 = vadd.f32 %v443, %v950
        %952 = vdwg.mxu0
        %953 = vmatpush.msra.mxu0 0.0
        %954 = vmatpush.msra.mxu0 0.0
        %955 = vmatpush.msra.mxu0 0.0
        %956 = vmatpush.msra.mxu0 0.0
        %957 = vmatpush.msra.mxu0 0.0
        %958 = vmatpush.msra.mxu0 0.0
        %959 = vmatpush.msra.mxu0 0.0
        %960 = vmatpush.msra.mxu0 0.0
        %961 = vmatpush.msra.mxu0 0.0
        %962 = vmatpush.msra.mxu0 0.0
        %963 = vmatpush.msra.mxu0 0.0
        %964 = vmatpush.msra.mxu0 0.0
        %965 = vmatpush.msra.mxu0 %v431
        %966 = vmatpush.msra.mxu0 %v430
        %967 = vmatpush.msra.mxu0 %v429
        %968 = vmatpush.msra.mxu0 %v428
        %969 = vmatmul.f32.gmra.mxu0 %v911
        %v970 = vpop.f32.mrf.mxu0
        %v971 = vadd.f32 %v447, %v970
        %972 = vdwg.mxu0
        %v974 = vsel %vm518, %v931, 0
        %v977 = vsel %vm518, %v951, 0
        %979 = vmatpush.xpose.msra.mxu0 0.0
        %980 = vmatpush.xpose.msra.mxu0 0.0
        %981 = vmatpush.xpose.msra.mxu0 0.0
        %982 = vmatpush.xpose.msra.mxu0 0.0
        %983 = vmatpush.xpose.msra.mxu0 0.0
        %984 = vmatpush.xpose.msra.mxu0 0.0
        %985 = vmatpush.xpose.msra.mxu0 0.0
        %986 = vmatpush.xpose.msra.mxu0 0.0
        %987 = vmatpush.xpose.msra.mxu0 0.0
        %988 = vmatpush.xpose.msra.mxu0 0.0
        %989 = vmatpush.xpose.msra.mxu0 0.0
        %990 = vmatpush.xpose.msra.mxu0 0.0
        %991 = vmatpush.xpose.msra.mxu0 0.0
        %992 = vmatpush.xpose.msra.mxu0 0.0
        %993 = vmatpush.xpose.msra.mxu0 0.0
        %994 = vmatpush.xpose.msra.mxu0 %v977
        %995 = vmatmul.f32.gmra.mxu0 %v974
        %v996 = vpop.f32.mrf.mxu0
        %v997 = vadd.f32 0.0, %v996
        %998 = vdwg.mxu0
        %v999 = vsel %vm518, %v997, -inf
        %1000 = vmax.xlane.f32.xlu0 %v999
        %v1001 = vpop.xlane.xlu0 %1000
        %v1002 = vsub.f32 %v997, %v1001
        %v1003 = vmul.f32 %v1002, 1.442695
        %v1004 = vpow.pop %v1003
        %v1005 = vsel %vm518, %v1004, 0.0
        %1006 = vadd.xlane.f32.xlu0 %v1005
        %v1007 = vpop.xlane.xlu0 %1006
        %v1008 = vrcp.pop %v1007
        %v1009 = vmul.f32 %v1004, %v1008
        %v1011 = vsel %vm518, %v1009, 0
        %1013 = vmatpush.msra.mxu0 0.0
        %1014 = vmatpush.msra.mxu0 0.0
        %1015 = vmatpush.msra.mxu0 0.0
        %1016 = vmatpush.msra.mxu0 0.0
        %1017 = vmatpush.msra.mxu0 0.0
        %1018 = vmatpush.msra.mxu0 0.0
        %1019 = vmatpush.msra.mxu0 0.0
        %1020 = vmatpush.msra.mxu0 0.0
        %1021 = vmatpush.msra.mxu0 0.0
        %1022 = vmatpush.msra.mxu0 0.0
        %1023 = vmatpush.msra.mxu0 0.0
        %1024 = vmatpush.msra.mxu0 0.0
        %1025 = vmatpush.msra.mxu0 0.0
        %1026 = vmatpush.msra.mxu0 0.0
        %1027 = vmatpush.msra.mxu0 0.0
        %1028 = vmatpush.msra.mxu0 %v971
        %1029 = vmatmul.f32.gmra.mxu0 %v1011
        %v1030 = vpop.f32.mrf.mxu0
        %v1031 = vadd.f32 0.0, %v1030
        %1032 = vdwg.mxu0
        %v1034 = vsel %vm518, %v1031, 0
        %1036 = vmatpush.msra.mxu0 0.0
        %1037 = vmatpush.msra.mxu0 0.0
        %1038 = vmatpush.msra.mxu0 0.0
        %1039 = vmatpush.msra.mxu0 0.0
        %1040 = vmatpush.msra.mxu0 0.0
        %1041 = vmatpush.msra.mxu0 0.0
        %1042 = vmatpush.msra.mxu0 0.0
        %1043 = vmatpush.msra.mxu0 0.0
        %1044 = vmatpush.msra.mxu0 0.0
        %1045 = vmatpush.msra.mxu0 0.0
        %1046 = vmatpush.msra.mxu0 0.0
        %1047 = vmatpush.msra.mxu0 0.0
        %1048 = vmatpush.msra.mxu0 0.0
        %1049 = vmatpush.msra.mxu0 0.0
        %1050 = vmatpush.msra.mxu0 0.0
        %1051 = vmatpush.msra.mxu0 %v432
        %1052 = vmatmul.f32.gmra.mxu0 %v1034
        %v1053 = vpop.f32.mrf.mxu0
        %v1054 = vadd.f32 0.0, %v1053
        %1055 = vdwg.mxu0
        %v1056 = vadd.f32 %v451, %v1054
        %1057 = vrot.lane.b32.xlu0 %v931, 120
        %v1058 = vpop.permute.xlu0 %1057
        %1059 = vrot.lane.b32.xlu0 %v951, 120
        %v1060 = vpop.permute.xlu0 %1059
        %v1061 = vsel %vm518, %v1058, 0
        %v1063 = vsel %vm518, %v1060, 0
        %1065 = vmatpush.xpose.msra.mxu0 0.0
        %1066 = vmatpush.xpose.msra.mxu0 0.0
        %1067 = vmatpush.xpose.msra.mxu0 0.0
        %1068 = vmatpush.xpose.msra.mxu0 0.0
        %1069 = vmatpush.xpose.msra.mxu0 0.0
        %1070 = vmatpush.xpose.msra.mxu0 0.0
        %1071 = vmatpush.xpose.msra.mxu0 0.0
        %1072 = vmatpush.xpose.msra.mxu0 0.0
        %1073 = vmatpush.xpose.msra.mxu0 0.0
        %1074 = vmatpush.xpose.msra.mxu0 0.0
        %1075 = vmatpush.xpose.msra.mxu0 0.0
        %1076 = vmatpush.xpose.msra.mxu0 0.0
        %1077 = vmatpush.xpose.msra.mxu0 0.0
        %1078 = vmatpush.xpose.msra.mxu0 0.0
        %1079 = vmatpush.xpose.msra.mxu0 0.0
        %1080 = vmatpush.xpose.msra.mxu0 %v1063
        %1081 = vmatmul.f32.gmra.mxu0 %v1061
        %v1082 = vpop.f32.mrf.mxu0
        %v1083 = vadd.f32 0.0, %v1082
        %1084 = vdwg.mxu0
        %v1085 = vsel %vm518, %v1083, -inf
        %1086 = vmax.xlane.f32.xlu0 %v1085
        %v1087 = vpop.xlane.xlu0 %1086
        %v1088 = vsub.f32 %v1083, %v1087
        %v1089 = vmul.f32 %v1088, 1.442695
        %v1090 = vpow.pop %v1089
        %v1091 = vsel %vm518, %v1090, 0.0
        %1092 = vadd.xlane.f32.xlu0 %v1091
        %v1093 = vpop.xlane.xlu0 %1092
        %v1094 = vrcp.pop %v1093
        %v1095 = vmul.f32 %v1090, %v1094
        %1097 = vrot.lane.b32.xlu0 %v971, 120
        %v1098 = vpop.permute.xlu0 %1097
        %v1101 = vsel %vm518, %v1095, 0
        %1103 = vmatpush.msra.mxu0 0.0
        %1104 = vmatpush.msra.mxu0 0.0
        %1105 = vmatpush.msra.mxu0 0.0
        %1106 = vmatpush.msra.mxu0 0.0
        %1107 = vmatpush.msra.mxu0 0.0
        %1108 = vmatpush.msra.mxu0 0.0
        %1109 = vmatpush.msra.mxu0 0.0
        %1110 = vmatpush.msra.mxu0 0.0
        %1111 = vmatpush.msra.mxu0 0.0
        %1112 = vmatpush.msra.mxu0 0.0
        %1113 = vmatpush.msra.mxu0 0.0
        %1114 = vmatpush.msra.mxu0 0.0
        %1115 = vmatpush.msra.mxu0 0.0
        %1116 = vmatpush.msra.mxu0 0.0
        %1117 = vmatpush.msra.mxu0 0.0
        %1118 = vmatpush.msra.mxu0 %v1098
        %1119 = vmatmul.f32.gmra.mxu0 %v1101
        %v1120 = vpop.f32.mrf.mxu0
        %v1121 = vadd.f32 0.0, %v1120
        %1122 = vdwg.mxu0
        %v1124 = vsel %vm518, %v1121, 0
        %1126 = vmatpush.msra.mxu0 0.0
        %1127 = vmatpush.msra.mxu0 0.0
        %1128 = vmatpush.msra.mxu0 0.0
        %1129 = vmatpush.msra.mxu0 0.0
        %1130 = vmatpush.msra.mxu0 0.0
        %1131 = vmatpush.msra.mxu0 0.0
        %1132 = vmatpush.msra.mxu0 0.0
        %1133 = vmatpush.msra.mxu0 0.0
        %1134 = vmatpush.msra.mxu0 0.0
        %1135 = vmatpush.msra.mxu0 0.0
        %1136 = vmatpush.msra.mxu0 0.0
        %1137 = vmatpush.msra.mxu0 0.0
        %1138 = vmatpush.msra.mxu0 0.0
        %1139 = vmatpush.msra.mxu0 0.0
        %1140 = vmatpush.msra.mxu0 0.0
        %1141 = vmatpush.msra.mxu0 %v433
        %1142 = vmatmul.f32.gmra.mxu0 %v1124
        %v1143 = vpop.f32.mrf.mxu0
        %v1144 = vadd.f32 0.0, %v1143
        %1145 = vdwg.mxu0
        %v1146 = vadd.f32 %v1056, %v1144
        %1147 = vrot.lane.b32.xlu0 %v931, 112
        %v1148 = vpop.permute.xlu0 %1147
        %1149 = vrot.lane.b32.xlu0 %v951, 112
        %v1150 = vpop.permute.xlu0 %1149
        %v1151 = vsel %vm518, %v1148, 0
        %v1153 = vsel %vm518, %v1150, 0
        %1155 = vmatpush.xpose.msra.mxu0 0.0
        %1156 = vmatpush.xpose.msra.mxu0 0.0
        %1157 = vmatpush.xpose.msra.mxu0 0.0
        %1158 = vmatpush.xpose.msra.mxu0 0.0
        %1159 = vmatpush.xpose.msra.mxu0 0.0
        %1160 = vmatpush.xpose.msra.mxu0 0.0
        %1161 = vmatpush.xpose.msra.mxu0 0.0
        %1162 = vmatpush.xpose.msra.mxu0 0.0
        %1163 = vmatpush.xpose.msra.mxu0 0.0
        %1164 = vmatpush.xpose.msra.mxu0 0.0
        %1165 = vmatpush.xpose.msra.mxu0 0.0
        %1166 = vmatpush.xpose.msra.mxu0 0.0
        %1167 = vmatpush.xpose.msra.mxu0 0.0
        %1168 = vmatpush.xpose.msra.mxu0 0.0
        %1169 = vmatpush.xpose.msra.mxu0 0.0
        %1170 = vmatpush.xpose.msra.mxu0 %v1153
        %1171 = vmatmul.f32.gmra.mxu0 %v1151
        %v1172 = vpop.f32.mrf.mxu0
        %v1173 = vadd.f32 0.0, %v1172
        %1174 = vdwg.mxu0
        %v1175 = vsel %vm518, %v1173, -inf
        %1176 = vmax.xlane.f32.xlu0 %v1175
        %v1177 = vpop.xlane.xlu0 %1176
        %v1178 = vsub.f32 %v1173, %v1177
        %v1179 = vmul.f32 %v1178, 1.442695
        %v1180 = vpow.pop %v1179
        %v1181 = vsel %vm518, %v1180, 0.0
        %1182 = vadd.xlane.f32.xlu0 %v1181
        %v1183 = vpop.xlane.xlu0 %1182
        %v1184 = vrcp.pop %v1183
        %v1185 = vmul.f32 %v1180, %v1184
        %1186 = vrot.lane.b32.xlu0 %v971, 112
        %v1187 = vpop.permute.xlu0 %1186
        %v1190 = vsel %vm518, %v1185, 0
        %1192 = vmatpush.msra.mxu0 0.0
        %1193 = vmatpush.msra.mxu0 0.0
        %1194 = vmatpush.msra.mxu0 0.0
        %1195 = vmatpush.msra.mxu0 0.0
        %1196 = vmatpush.msra.mxu0 0.0
        %1197 = vmatpush.msra.mxu0 0.0
        %1198 = vmatpush.msra.mxu0 0.0
        %1199 = vmatpush.msra.mxu0 0.0
        %1200 = vmatpush.msra.mxu0 0.0
        %1201 = vmatpush.msra.mxu0 0.0
        %1202 = vmatpush.msra.mxu0 0.0
        %1203 = vmatpush.msra.mxu0 0.0
        %1204 = vmatpush.msra.mxu0 0.0
        %1205 = vmatpush.msra.mxu0 0.0
        %1206 = vmatpush.msra.mxu0 0.0
        %1207 = vmatpush.msra.mxu0 %v1187
        %1208 = vmatmul.f32.gmra.mxu0 %v1190
        %v1209 = vpop.f32.mrf.mxu0
        %v1210 = vadd.f32 0.0, %v1209
        %1211 = vdwg.mxu0
        %v1213 = vsel %vm518, %v1210, 0
        %1215 = vmatpush.msra.mxu0 0.0
        %1216 = vmatpush.msra.mxu0 0.0
        %1217 = vmatpush.msra.mxu0 0.0
        %1218 = vmatpush.msra.mxu0 0.0
        %1219 = vmatpush.msra.mxu0 0.0
        %1220 = vmatpush.msra.mxu0 0.0
        %1221 = vmatpush.msra.mxu0 0.0
        %1222 = vmatpush.msra.mxu0 0.0
        %1223 = vmatpush.msra.mxu0 0.0
        %1224 = vmatpush.msra.mxu0 0.0
        %1225 = vmatpush.msra.mxu0 0.0
        %1226 = vmatpush.msra.mxu0 0.0
        %1227 = vmatpush.msra.mxu0 0.0
        %1228 = vmatpush.msra.mxu0 0.0
        %1229 = vmatpush.msra.mxu0 0.0
        %1230 = vmatpush.msra.mxu0 %v434
        %1231 = vmatmul.f32.gmra.mxu0 %v1213
        %v1232 = vpop.f32.mrf.mxu0
        %v1233 = vadd.f32 0.0, %v1232
        %1234 = vdwg.mxu0
        %v1235 = vadd.f32 %v1146, %v1233
        %1236 = vrot.lane.b32.xlu0 %v931, 104
        %v1237 = vpop.permute.xlu0 %1236
        %1238 = vrot.lane.b32.xlu0 %v951, 104
        %v1239 = vpop.permute.xlu0 %1238
        %v1240 = vsel %vm518, %v1237, 0
        %v1242 = vsel %vm518, %v1239, 0
        %1244 = vmatpush.xpose.msra.mxu0 0.0
        %1245 = vmatpush.xpose.msra.mxu0 0.0
        %1246 = vmatpush.xpose.msra.mxu0 0.0
        %1247 = vmatpush.xpose.msra.mxu0 0.0
        %1248 = vmatpush.xpose.msra.mxu0 0.0
        %1249 = vmatpush.xpose.msra.mxu0 0.0
        %1250 = vmatpush.xpose.msra.mxu0 0.0
        %1251 = vmatpush.xpose.msra.mxu0 0.0
        %1252 = vmatpush.xpose.msra.mxu0 0.0
        %1253 = vmatpush.xpose.msra.mxu0 0.0
        %1254 = vmatpush.xpose.msra.mxu0 0.0
        %1255 = vmatpush.xpose.msra.mxu0 0.0
        %1256 = vmatpush.xpose.msra.mxu0 0.0
        %1257 = vmatpush.xpose.msra.mxu0 0.0
        %1258 = vmatpush.xpose.msra.mxu0 0.0
        %1259 = vmatpush.xpose.msra.mxu0 %v1242
        %1260 = vmatmul.f32.gmra.mxu0 %v1240
        %v1261 = vpop.f32.mrf.mxu0
        %v1262 = vadd.f32 0.0, %v1261
        %1263 = vdwg.mxu0
        %v1264 = vsel %vm518, %v1262, -inf
        %1265 = vmax.xlane.f32.xlu0 %v1264
        %v1266 = vpop.xlane.xlu0 %1265
        %v1267 = vsub.f32 %v1262, %v1266
        %v1268 = vmul.f32 %v1267, 1.442695
        %v1269 = vpow.pop %v1268
        %v1270 = vsel %vm518, %v1269, 0.0
        %1271 = vadd.xlane.f32.xlu0 %v1270
        %v1272 = vpop.xlane.xlu0 %1271
        %v1273 = vrcp.pop %v1272
        %v1274 = vmul.f32 %v1269, %v1273
        %1275 = vrot.lane.b32.xlu0 %v971, 104
        %v1276 = vpop.permute.xlu0 %1275
        %v1279 = vsel %vm518, %v1274, 0
        %1281 = vmatpush.msra.mxu0 0.0
        %1282 = vmatpush.msra.mxu0 0.0
        %1283 = vmatpush.msra.mxu0 0.0
        %1284 = vmatpush.msra.mxu0 0.0
        %1285 = vmatpush.msra.mxu0 0.0
        %1286 = vmatpush.msra.mxu0 0.0
        %1287 = vmatpush.msra.mxu0 0.0
        %1288 = vmatpush.msra.mxu0 0.0
        %1289 = vmatpush.msra.mxu0 0.0
        %1290 = vmatpush.msra.mxu0 0.0
        %1291 = vmatpush.msra.mxu0 0.0
        %1292 = vmatpush.msra.mxu0 0.0
        %1293 = vmatpush.msra.mxu0 0.0
        %1294 = vmatpush.msra.mxu0 0.0
        %1295 = vmatpush.msra.mxu0 0.0
        %1296 = vmatpush.msra.mxu0 %v1276
        %1297 = vmatmul.f32.gmra.mxu0 %v1279
        %v1298 = vpop.f32.mrf.mxu0
        %v1299 = vadd.f32 0.0, %v1298
        %1300 = vdwg.mxu0
        %v1302 = vsel %vm518, %v1299, 0
        %1304 = vmatpush.msra.mxu0 0.0
        %1305 = vmatpush.msra.mxu0 0.0
        %1306 = vmatpush.msra.mxu0 0.0
        %1307 = vmatpush.msra.mxu0 0.0
        %1308 = vmatpush.msra.mxu0 0.0
        %1309 = vmatpush.msra.mxu0 0.0
        %1310 = vmatpush.msra.mxu0 0.0
        %1311 = vmatpush.msra.mxu0 0.0
        %1312 = vmatpush.msra.mxu0 0.0
        %1313 = vmatpush.msra.mxu0 0.0
        %1314 = vmatpush.msra.mxu0 0.0
        %1315 = vmatpush.msra.mxu0 0.0
        %1316 = vmatpush.msra.mxu0 0.0
        %1317 = vmatpush.msra.mxu0 0.0
        %1318 = vmatpush.msra.mxu0 0.0
        %1319 = vmatpush.msra.mxu0 %v435
        %1320 = vmatmul.f32.gmra.mxu0 %v1302
        %v1321 = vpop.f32.mrf.mxu0
        %v1322 = vadd.f32 0.0, %v1321
        %1323 = vdwg.mxu0
        %v1324 = vadd.f32 %v1235, %v1322
        %v1325 = vadd.f32 %v909, %v1324
        %v1326 = vsel %vm454, %v1325, 0.0
        %v1327 = vrot.slane %v1326, 4
        %v1328 = vadd.f32 %v1326, %v1327
        %v1329 = vrot.slane %v1328, 2
        %v1330 = vadd.f32 %v1328, %v1329
        %v1331 = vrot.slane %v1330, 1
        %v1332 = vadd.f32 %v1330, %v1331
        %v1333 = vmul.f32 %v1332, %v885
        %v1334 = vsub.f32 %v1325, %v1333
        %v1335 = vmul.f32 %v1334, %v1334
        %v1336 = vsel %vm454, %v1335, 0.0
        %v1337 = vrot.slane %v1336, 4
        %v1338 = vadd.f32 %v1336, %v1337
        %v1339 = vrot.slane %v1338, 2
        %v1340 = vadd.f32 %v1338, %v1339
        %v1341 = vrot.slane %v1340, 1
        %v1342 = vadd.f32 %v1340, %v1341
        %v1343 = vmul.f32 %v1342, %v885
        %v1344 = vadd.f32 %v1343, 1e-05
        %v1345 = vrsqrt.pop %v1344
        %v1346 = vmul.f32 %v1345, %v1344
        %v1347 = vmul.f32 %v1346, %v1345
        %v1348 = vmul.f32 0.5, %v1347
        %v1349 = vsub.f32 1.5, %v1348
        %v1350 = vmul.f32 %v1345, %v1349
        %vm1351 = vweird.f32 %v1344
        %vm1352 = vweird.f32 %v1345
        %vm1353 = vmor %vm1351, %vm1352
        %v1354 = vsel %vm1353, %v1345, %v1350
        %v1355 = vmul.f32 %v1334, %v1354
        %v1356 = vmax.f32 %v1355, 0.0
        %1357 = vst.msk [vmem:[%s415] sm:$0xff] %vm454, %v1356
        %s1358 = sand.u32 %s230, 1
        %s1359 = scalar_lea.sflag [#allocation4], %s1358
        %s1360 = sand.u32 %s230, 1
        %s1361 = smul.addr %s1360, 8
        %s1362 = scalar_lea.vmem [#allocation11], %s1361
        // Predicated region
        $region77: #{tpu_custom_call.1} parent=55 // pred_check
          %p1363 = pneg %p240
        $region78: #{tpu_custom_call.1} parent=55 // pred_check_branch
          %1365 = sbr.rel (%p1363) target = $region80
        $region79: #{tpu_custom_call.1} parent=55 // pred_region
          %1367 = vsyncadd %s1359, 0
          %s1368 = smul.addr %s28, 8
          %s1369 = scalar_lea.hbm %s9, %s1368
          %s1371 = sshll.u32 %s1362, 4
          %s1372 = int_to_ptr.vmem [resolvable:$true] %s1371
          %s1373 = sshll.u32 %s1369, 4
          %s1374 = int_to_ptr.hbm [resolvable:$true] %s1373
          %1376 = dma.vmem_to_hbm [thread:$0]  %s1372, 128, %s1374, %s1359
        $region80: #{tpu_custom_call.1} parent=55 // pred_fallthru
          _
      $region56: #{tpu_custom_call.1} parent=5 // pred_fallthru
        _
      %p1377 = scmp.le.s32.totalorder 2, %s23
      // Predicated region
      $region81: #{tpu_custom_call.1} parent=5 // pred_check
        %p1378 = pneg %p1377
      $region82: #{tpu_custom_call.1} parent=5 // pred_check_branch
        %1380 = sbr.rel (%p1378) target = $region84
      $region83: #{tpu_custom_call.1} parent=5 // pred_region
        %s1381 = ssub.s32 %s23, 2
        // Predicated region
        $region85: #{tpu_custom_call.1} parent=83 // pred_check
          %p1382 = pneg %p246
        $region86: #{tpu_custom_call.1} parent=83 // pred_check_branch
          %1384 = sbr.rel (%p1382) target = $region88
        $region87: #{tpu_custom_call.1} parent=83 // pred_region
          %s1385 = sand.u32 %s231, 1
          %s1386 = scalar_lea.sflag [#allocation4], %s1385
          %s1387 = sand.u32 %s231, 1
          %s1388 = smul.addr %s1387, 8
          %s1389 = scalar_lea.vmem [#allocation11], %s1388
          %1391 = dma.done %s1386, 128
        $region88: #{tpu_custom_call.1} parent=83 // pred_fallthru
          _
      $region84: #{tpu_custom_call.1} parent=5 // pred_fallthru
        _
    $region6: #{tpu_custom_call.1} parent=1 // loop_footer
      %s27 = sadd.s32 1, %s23
    $region7: #{tpu_custom_call.1} parent=1 // loop_footer_branch
      %22 = sbr.rel target = $region3
    $region8: #{tpu_custom_call.1} parent=1 // loop_exit
      _
    %1392 = vsyncpa [#allocation3], 1
    %s1393 = scalar_lea.sflag [#allocation3], 1
    %1394 = vsyncpa %s1393, 1
    %1395 = vsyncpa [#allocation6], 1
    %1396 = vsyncpa [#allocation9], 1
    %1397 = vsyncpa [#allocation4], 1
    %s1398 = scalar_lea.sflag [#allocation4], 1
    %1399 = vsyncpa %s1398, 1

</llo_original>
